<compile_context>
chip_gen: v7x
topology: tpu7x:2x2x1
jax: 0.10.0
libtpu: 0.0.40
codegen_flags: <defaults>
</compile_context>

<pallas_src>
import functools

import jax
import jax.numpy as jnp
from jax import lax
from jax.experimental import pallas as pl
from jax.experimental.pallas import tpu as pltpu

_HALO = 128  # lane-aligned halo / inter-image gap (requires W + 1 <= _HALO)


def _segmenter_kernel(x_ref, w3g_ref, shift_ref, w1p_ref, b1p_ref, m_ref,
                      o_ref, xstack_ref, acc_ref, *, width, n_imgs, seg, span):
    """One grid step processes `n_imgs` images laid side by side on lanes.

    x_ref     : (n_imgs, C, P)  images, channels on sublanes, P=H*W on lanes (f32)
    w3g_ref   : (3, C, 3*C)     dx-grouped folded 3x3 weights, [dy, c_out, dx*C+c_in] (bf16)
    shift_ref : (C, 1)          folded BN shift (f32)
    w1p_ref   : (8, C)          1x1 head weights, zero-padded to 8 rows (bf16)
    b1p_ref   : (8, 1)          1x1 head bias, zero-padded (f32)
    m_ref     : (2, P)          edge keep-masks: [0]=dx=-1 block, [1]=dx=+1 block (f32)
    o_ref     : (n_imgs, 8, P)  sigmoid output (f32)
    xstack_ref: (3*C, span+2*_HALO) dx-stacked lane-padded images (bf16)
    acc_ref   : (C, span)       f32 conv accumulator
    """
    _, C, P = x_ref.shape
    W = width

    # ---- build the dx-stacked, lane-padded image slab(s) in bf16 ----------
    for n in range(n_imgs):
        base = _HALO + n * seg
        # Zero only the strips the shifted slabs actually read; the right strip
        # also covers the inter-image gap so no read lane is ever uninitialized.
        xstack_ref[:, base - (W + 1): base + 1] = jnp.zeros(
            (3 * C, W + 2), jnp.bfloat16)
        xstack_ref[:, base + P - 1: base + P + _HALO] = jnp.zeros(
            (3 * C, _HALO + 1), jnp.bfloat16)

        img = x_ref[n]                                        # (C, P) f32
        # dx = -1 block: a source in the last column of a row is invalid.
        xstack_ref[0:C, base + 1: base + 1 + P] = (
            img * m_ref[0:1, :]).astype(jnp.bfloat16)
        # dx = 0 block: unmasked.
        xstack_ref[C:2 * C, base: base + P] = img.astype(jnp.bfloat16)
        # dx = +1 block: a source in the first column of a row is invalid.
        xstack_ref[2 * C:3 * C, base - 1: base - 1 + P] = (
            img * m_ref[1:2, :]).astype(jnp.bfloat16)

    # ---- 3x3 conv as three deep-K (K = 3*C) MXU matmuls, one per dy -------
    acc_ref[...] = jnp.dot(
        w3g_ref[0], xstack_ref[:, _HALO - W: _HALO - W + span],
        preferred_element_type=jnp.float32)
    acc_ref[...] += jnp.dot(
        w3g_ref[1], xstack_ref[:, _HALO: _HALO + span],
        preferred_element_type=jnp.float32)
    acc_ref[...] += jnp.dot(
        w3g_ref[2], xstack_ref[:, _HALO + W: _HALO + W + span],
        preferred_element_type=jnp.float32)

    # ---- BatchNorm shift (scale already folded into weights) + ReLU --------
    y = jnp.maximum(acc_ref[...] + shift_ref[...], 0.0).astype(jnp.bfloat16)

    # ---- 1x1 head (+ bias) + sigmoid, channel-major, lane-dense ------------
    z = jnp.dot(w1p_ref[...], y, preferred_element_type=jnp.float32) + b1p_ref[...]
    s = jax.nn.sigmoid(z)
    for n in range(n_imgs):
        o_ref[n] = s[:, n * seg: n * seg + P]


def prepare_params(w3_oihw, gamma, beta, run_mean, run_var, eps, w1_oihw, b1,
                   height, width):
    """One-time parameter prep: BN fold, dx-grouped weight layout, bf16 cast,
    head padding to a full sublane tile, precomputed f32 edge masks."""
    co, ci = w3_oihw.shape[:2]
    scale = gamma / jnp.sqrt(run_var + eps)                       # (C,)
    w_eff = w3_oihw * scale[:, None, None, None]                  # fold BN scale
    # w3g[dy, c_out, dx*C + c_in] = w_eff[c_out, c_in, dy, dx]
    w3g = jnp.transpose(w_eff, (2, 0, 3, 1)).reshape(3, co, 3 * ci)
    w3g = w3g.astype(jnp.bfloat16)
    shift = (beta - run_mean * scale).reshape(-1, 1)              # (C, 1)

    cout = w1_oihw.shape[0]
    cout_p = max(8, ((cout + 7) // 8) * 8)                        # full sublane tile
    w1p = jnp.zeros((cout_p, ci), jnp.float32)
    w1p = w1p.at[:cout].set(w1_oihw.reshape(cout, ci)).astype(jnp.bfloat16)
    b1p = jnp.zeros((cout_p, 1), jnp.float32).at[:cout, 0].set(b1)

    col = jnp.arange(height * width, dtype=jnp.int32) % width
    masks = jnp.stack([(col <= width - 2).astype(jnp.float32),    # dx = -1 block
                       (col >= 1).astype(jnp.float32)], axis=0)   # dx = +1 block
    return w3g, shift, w1p, b1p, masks


def _default_images_per_step(batch):
    """v7x has 2 TensorCores/chip -> keep a per-image parallel grid there;
    single-TC chips (v5e / v6e) fold the whole batch into one grid step."""
    try:
        kind = jax.devices()[0].device_kind.lower()
    except Exception:
        kind = ""
    if "v7" in kind or "7x" in kind:
        return 1
    return batch


@functools.partial(jax.jit, static_argnames=("images_per_step", "out_channels"))
def _segmenter_forward_impl(x_nchw, w3g, shift, w1p, b1p, masks, *,
                            images_per_step, out_channels):
    N, C, H, W = x_nchw.shape
    nb = images_per_step
    assert N % nb == 0, (N, nb)
    assert W + 1 <= _HALO, "halo assumes W < 128; tile the width for larger W"
    P = H * W
    CP = w1p.shape[0]
    seg = P + _HALO                        # lane stride between image interiors
    span = (nb - 1) * seg + P              # matmul lane extent per grid step
    total = span + 2 * _HALO               # stacked / padded scratch width

    x3 = x_nchw.reshape(N, C, P)           # free reshape, no transpose / pad

    flops = 2 * N * P * (9 * C * C + C * CP)
    bytes_accessed = (x3.size * 4 + w3g.size * 2 + shift.size * 4
                      + w1p.size * 2 + b1p.size * 4 + masks.size * 4
                      + N * CP * P * 4)

    kernel = functools.partial(_segmenter_kernel, width=W, n_imgs=nb,
                               seg=seg, span=span)
    out3 = pl.pallas_call(
        kernel,
        out_shape=jax.ShapeDtypeStruct((N, CP, P), jnp.float32),
        grid=(N // nb,),
        in_specs=[
            pl.BlockSpec((nb, C, P), lambda i: (i, 0, 0)),
            pl.BlockSpec((3, C, 3 * C), lambda i: (0, 0, 0)),
            pl.BlockSpec((C, 1), lambda i: (0, 0)),
            pl.BlockSpec((CP, C), lambda i: (0, 0)),
            pl.BlockSpec((CP, 1), lambda i: (0, 0)),
            pl.BlockSpec((2, P), lambda i: (0, 0)),
        ],
        out_specs=pl.BlockSpec((nb, CP, P), lambda i: (i, 0, 0)),
        scratch_shapes=[
            pltpu.VMEM((3 * C, total), jnp.bfloat16),   # dx-stacked padded images
            pltpu.VMEM((C, span), jnp.float32),         # f32 conv accumulator
        ],
        compiler_params=pltpu.CompilerParams(
            dimension_semantics=("parallel",)),
        cost_estimate=pl.CostEstimate(
            flops=flops,
            transcendentals=2 * N * CP * P,             # sigmoid ~ exp + recip
            bytes_accessed=bytes_accessed),
    )(x3, w3g, shift, w1p, b1p, masks)

    return out3[:, :out_channels, :].reshape(N, out_channels, H, W)


def segmenter_forward(x_nchw, params, out_channels=3, images_per_step=None):
    """x_nchw: (N, 64, H, W) f32 -> (N, out_channels, H, W) f32."""
    if images_per_step is None:
        images_per_step = _default_images_per_step(x_nchw.shape[0])
    return _segmenter_forward_impl(x_nchw, *params,
                                   images_per_step=images_per_step,
                                   out_channels=out_channels)


def _reference_forward(x, w3, gamma, beta, run_mean, run_var, eps, w1, b1):
    """Pure-JAX f32 reference (lax.conv) for validation."""
    y = lax.conv_general_dilated(
        x, w3, window_strides=(1, 1), padding="SAME",
        dimension_numbers=("NCHW", "OIHW", "NCHW"))
    inv = 1.0 / jnp.sqrt(run_var + eps)
    y = (y - run_mean[None, :, None, None]) * inv[None, :, None, None]
    y = y * gamma[None, :, None, None] + beta[None, :, None, None]
    y = jnp.maximum(y, 0.0)
    z = lax.conv_general_dilated(
        y, w1, window_strides=(1, 1), padding="VALID",
        dimension_numbers=("NCHW", "OIHW", "NCHW"))
    z = z + b1[None, :, None, None]
    return jax.nn.sigmoid(z)


if __name__ == "__main__":
    key = jax.random.PRNGKey(0)
    k_x, k_w3, k_g, k_b, k_m, k_v, k_w1, k_b1 = jax.random.split(key, 8)

    N, C, H, W = 2, 64, 16, 16       # channels fixed at 64 by the module
    OUT = 3
    EPS = 1e-5

    x = jax.random.normal(k_x, (N, C, H, W), jnp.float32)

    # Parameters in PyTorch layouts (deterministic synthetic init).
    w3 = jax.random.normal(k_w3, (C, C, 3, 3), jnp.float32) * 0.05    # OIHW
    gamma = 1.0 + 0.1 * jax.random.normal(k_g, (C,), jnp.float32)
    beta = 0.1 * jax.random.normal(k_b, (C,), jnp.float32)
    run_mean = 0.1 * jax.random.normal(k_m, (C,), jnp.float32)
    run_var = jnp.abs(jax.random.normal(k_v, (C,), jnp.float32)) + 0.5
    w1 = jax.random.normal(k_w1, (OUT, C, 1, 1), jnp.float32) * 0.1   # OIHW 1x1
    b1 = 0.1 * jax.random.normal(k_b1, (OUT,), jnp.float32)

    params = prepare_params(w3, gamma, beta, run_mean, run_var, EPS, w1, b1, H, W)
    ref = _reference_forward(x, w3, gamma, beta, run_mean, run_var, EPS, w1, b1)

    # Validate BOTH batching modes (per-image grid for v7x, batch-folded grid
    # for single-TC v5e/v6e) regardless of which chip we happen to be on.
    for nb in (1, N):
        out = segmenter_forward(x, params, out_channels=OUT, images_per_step=nb)
        out = jax.block_until_ready(out)
        assert out.shape == (N, OUT, H, W), out.shape
        max_err = float(jnp.max(jnp.abs(out - ref)))
        # bf16 matmul inputs (f32 accumulation) -> relaxed tolerance vs f32 ref.
        assert max_err < 2e-2, (nb, max_err)

    # Device-selected default path.
    out = jax.block_until_ready(segmenter_forward(x, params, out_channels=OUT))
    assert out.shape == (N, OUT, H, W), out.shape

    print("KERNEL_OK")
</pallas_src>

<mosaic_0001>
module attributes {stable_mosaic.version = 11 : i64} {
  func.func @_segmenter_kernel(%arg0: i32, %arg1: memref<1x64x256xf32, #tpu.memory_space<vmem>>, %arg2: memref<3x64x192xbf16, #tpu.memory_space<vmem>>, %arg3: memref<64x1xf32, #tpu.memory_space<vmem>>, %arg4: memref<8x64xbf16, #tpu.memory_space<vmem>>, %arg5: memref<8x1xf32, #tpu.memory_space<vmem>>, %arg6: memref<2x256xf32, #tpu.memory_space<vmem>>, %arg7: memref<1x8x256xf32, #tpu.memory_space<vmem>>, %arg8: memref<192x512xbf16, #tpu.memory_space<vmem>>, %arg9: memref<64x256xf32, #tpu.memory_space<vmem>>) attributes {dimension_semantics = [#tpu.dimension_semantics<parallel>], iteration_bounds = array<i64: 2>, scalar_prefetch = 0 : i64, scratch_operands = 2 : i64, tpu.core_type = #tpu.core_type<tc>, window_params = [{transform_indices = @transform_0, window_bounds = array<i64: 1, 64, 256>}, {pipeline_mode = #tpu.pipeline_mode<synchronous>, transform_indices = @transform_1, window_bounds = array<i64: 3, 64, 192>}, {pipeline_mode = #tpu.pipeline_mode<synchronous>, transform_indices = @transform_2, window_bounds = array<i64: 64, 1>}, {pipeline_mode = #tpu.pipeline_mode<synchronous>, transform_indices = @transform_3, window_bounds = array<i64: 8, 64>}, {pipeline_mode = #tpu.pipeline_mode<synchronous>, transform_indices = @transform_4, window_bounds = array<i64: 8, 1>}, {pipeline_mode = #tpu.pipeline_mode<synchronous>, transform_indices = @transform_5, window_bounds = array<i64: 2, 256>}, {transform_indices = @transform_6, window_bounds = array<i64: 1, 8, 256>}]} {
    %cst = arith.constant 0.000000e+00 : bf16
    %0 = vector.broadcast %cst : bf16 to vector<192x18xbf16>
    %c0 = arith.constant 0 : index
    %c111 = arith.constant 111 : index
    %1 = vector.load %arg8[%c0, %c111] : memref<192x512xbf16, #tpu.memory_space<vmem>>, vector<192x18xbf16>
    tpu.vector_store %arg8[%c0, %c111], %0 {strides = array<i32>} : memref<192x512xbf16, #tpu.memory_space<vmem>>, vector<192x18xbf16>,
    %cst_0 = arith.constant 0.000000e+00 : bf16
    %2 = vector.broadcast %cst_0 : bf16 to vector<192x129xbf16>
    %c0_1 = arith.constant 0 : index
    %c383 = arith.constant 383 : index
    %3 = vector.load %arg8[%c0_1, %c383] : memref<192x512xbf16, #tpu.memory_space<vmem>>, vector<192x129xbf16>
    tpu.vector_store %arg8[%c0_1, %c383], %2 {strides = array<i32>} : memref<192x512xbf16, #tpu.memory_space<vmem>>, vector<192x129xbf16>,
    %c0_2 = arith.constant 0 : index
    %c0_3 = arith.constant 0 : index
    %c0_4 = arith.constant 0 : index
    %4 = vector.load %arg1[%c0_2, %c0_3, %c0_4] : memref<1x64x256xf32, #tpu.memory_space<vmem>>, vector<1x64x256xf32>
    %5 = vector.shape_cast %4 : vector<1x64x256xf32> to vector<64x256xf32>
    %c0_5 = arith.constant 0 : index
    %c0_6 = arith.constant 0 : index
    %6 = vector.load %arg6[%c0_5, %c0_6] : memref<2x256xf32, #tpu.memory_space<vmem>>, vector<1x256xf32>
    %7 = vector.broadcast %6 : vector<1x256xf32> to vector<64x256xf32>
    %8 = arith.mulf %5, %7 : vector<64x256xf32>
    %9 = arith.truncf %8 : vector<64x256xf32> to vector<64x256xbf16>
    %c0_7 = arith.constant 0 : index
    %c129 = arith.constant 129 : index
    %10 = vector.load %arg8[%c0_7, %c129] : memref<192x512xbf16, #tpu.memory_space<vmem>>, vector<64x256xbf16>
    tpu.vector_store %arg8[%c0_7, %c129], %9 {strides = array<i32>} : memref<192x512xbf16, #tpu.memory_space<vmem>>, vector<64x256xbf16>,
    %11 = arith.truncf %5 : vector<64x256xf32> to vector<64x256xbf16>
    %c64 = arith.constant 64 : index
    %c128 = arith.constant 128 : index
    %12 = vector.load %arg8[%c64, %c128] : memref<192x512xbf16, #tpu.memory_space<vmem>>, vector<64x256xbf16>
    tpu.vector_store %arg8[%c64, %c128], %11 {strides = array<i32>} : memref<192x512xbf16, #tpu.memory_space<vmem>>, vector<64x256xbf16>,
    %c1 = arith.constant 1 : index
    %c0_8 = arith.constant 0 : index
    %13 = vector.load %arg6[%c1, %c0_8] : memref<2x256xf32, #tpu.memory_space<vmem>>, vector<1x256xf32>
    %14 = vector.broadcast %13 : vector<1x256xf32> to vector<64x256xf32>
    %15 = arith.mulf %5, %14 : vector<64x256xf32>
    %16 = arith.truncf %15 : vector<64x256xf32> to vector<64x256xbf16>
    %c128_9 = arith.constant 128 : index
    %c127 = arith.constant 127 : index
    %17 = vector.load %arg8[%c128_9, %c127] : memref<192x512xbf16, #tpu.memory_space<vmem>>, vector<64x256xbf16>
    tpu.vector_store %arg8[%c128_9, %c127], %16 {strides = array<i32>} : memref<192x512xbf16, #tpu.memory_space<vmem>>, vector<64x256xbf16>,
    %c0_10 = arith.constant 0 : index
    %c0_11 = arith.constant 0 : index
    %c0_12 = arith.constant 0 : index
    %18 = vector.load %arg2[%c0_10, %c0_11, %c0_12] : memref<3x64x192xbf16, #tpu.memory_space<vmem>>, vector<1x64x192xbf16>
    %19 = vector.shape_cast %18 : vector<1x64x192xbf16> to vector<64x192xbf16>
    %c0_13 = arith.constant 0 : index
    %c112 = arith.constant 112 : index
    %20 = vector.load %arg8[%c0_13, %c112] : memref<192x512xbf16, #tpu.memory_space<vmem>>, vector<192x256xbf16>
    %cst_14 = arith.constant dense<0.000000e+00> : vector<64x256xf32>
    %21 = tpu.matmul %19, %20, %cst_14 {dimension_numbers = #tpu.dot_dimension_numbers<[1], [0], [0], [1], [0, 0, 1, 1], [], []>} : vector<64x192xbf16>, vector<192x256xbf16>, vector<64x256xf32> -> vector<64x256xf32>
    %c0_15 = arith.constant 0 : index
    %c0_16 = arith.constant 0 : index
    %22 = vector.load %arg9[%c0_15, %c0_16] : memref<64x256xf32, #tpu.memory_space<vmem>>, vector<64x256xf32>
    tpu.vector_store %arg9[%c0_15, %c0_16], %21 {strides = array<i32>} : memref<64x256xf32, #tpu.memory_space<vmem>>, vector<64x256xf32>,
    %c0_17 = arith.constant 0 : index
    %c0_18 = arith.constant 0 : index
    %23 = vector.load %arg9[%c0_17, %c0_18] : memref<64x256xf32, #tpu.memory_space<vmem>>, vector<64x256xf32>
    %c1_19 = arith.constant 1 : index
    %c0_20 = arith.constant 0 : index
    %c0_21 = arith.constant 0 : index
    %24 = vector.load %arg2[%c1_19, %c0_20, %c0_21] : memref<3x64x192xbf16, #tpu.memory_space<vmem>>, vector<1x64x192xbf16>
    %25 = vector.shape_cast %24 : vector<1x64x192xbf16> to vector<64x192xbf16>
    %c0_22 = arith.constant 0 : index
    %c128_23 = arith.constant 128 : index
    %26 = vector.load %arg8[%c0_22, %c128_23] : memref<192x512xbf16, #tpu.memory_space<vmem>>, vector<192x256xbf16>
    %cst_24 = arith.constant dense<0.000000e+00> : vector<64x256xf32>
    %27 = tpu.matmul %25, %26, %cst_24 {dimension_numbers = #tpu.dot_dimension_numbers<[1], [0], [0], [1], [0, 0, 1, 1], [], []>} : vector<64x192xbf16>, vector<192x256xbf16>, vector<64x256xf32> -> vector<64x256xf32>
    %28 = arith.addf %23, %27 : vector<64x256xf32>
    %c0_25 = arith.constant 0 : index
    %c0_26 = arith.constant 0 : index
    %29 = vector.load %arg9[%c0_25, %c0_26] : memref<64x256xf32, #tpu.memory_space<vmem>>, vector<64x256xf32>
    tpu.vector_store %arg9[%c0_25, %c0_26], %28 {strides = array<i32>} : memref<64x256xf32, #tpu.memory_space<vmem>>, vector<64x256xf32>,
    %c0_27 = arith.constant 0 : index
    %c0_28 = arith.constant 0 : index
    %30 = vector.load %arg9[%c0_27, %c0_28] : memref<64x256xf32, #tpu.memory_space<vmem>>, vector<64x256xf32>
    %c2 = arith.constant 2 : index
    %c0_29 = arith.constant 0 : index
    %c0_30 = arith.constant 0 : index
    %31 = vector.load %arg2[%c2, %c0_29, %c0_30] : memref<3x64x192xbf16, #tpu.memory_space<vmem>>, vector<1x64x192xbf16>
    %32 = vector.shape_cast %31 : vector<1x64x192xbf16> to vector<64x192xbf16>
    %c0_31 = arith.constant 0 : index
    %c144 = arith.constant 144 : index
    %33 = vector.load %arg8[%c0_31, %c144] : memref<192x512xbf16, #tpu.memory_space<vmem>>, vector<192x256xbf16>
    %cst_32 = arith.constant dense<0.000000e+00> : vector<64x256xf32>
    %34 = tpu.matmul %32, %33, %cst_32 {dimension_numbers = #tpu.dot_dimension_numbers<[1], [0], [0], [1], [0, 0, 1, 1], [], []>} : vector<64x192xbf16>, vector<192x256xbf16>, vector<64x256xf32> -> vector<64x256xf32>
    %35 = arith.addf %30, %34 : vector<64x256xf32>
    %c0_33 = arith.constant 0 : index
    %c0_34 = arith.constant 0 : index
    %36 = vector.load %arg9[%c0_33, %c0_34] : memref<64x256xf32, #tpu.memory_space<vmem>>, vector<64x256xf32>
    tpu.vector_store %arg9[%c0_33, %c0_34], %35 {strides = array<i32>} : memref<64x256xf32, #tpu.memory_space<vmem>>, vector<64x256xf32>,
    %c0_35 = arith.constant 0 : index
    %c0_36 = arith.constant 0 : index
    %37 = vector.load %arg9[%c0_35, %c0_36] : memref<64x256xf32, #tpu.memory_space<vmem>>, vector<64x256xf32>
    %c0_37 = arith.constant 0 : index
    %c0_38 = arith.constant 0 : index
    %38 = vector.load %arg3[%c0_37, %c0_38] : memref<64x1xf32, #tpu.memory_space<vmem>>, vector<64x1xf32>
    %39 = vector.broadcast %38 : vector<64x1xf32> to vector<64x256xf32>
    %40 = arith.addf %37, %39 : vector<64x256xf32>
    %cst_39 = arith.constant 0.000000e+00 : f32
    %41 = vector.broadcast %cst_39 : f32 to vector<64x256xf32>
    %42 = arith.maximumf %40, %41 : vector<64x256xf32>
    %43 = arith.truncf %42 : vector<64x256xf32> to vector<64x256xbf16>
    %c0_40 = arith.constant 0 : index
    %c0_41 = arith.constant 0 : index
    %44 = vector.load %arg4[%c0_40, %c0_41] : memref<8x64xbf16, #tpu.memory_space<vmem>>, vector<8x64xbf16>
    %cst_42 = arith.constant dense<0.000000e+00> : vector<8x256xf32>
    %45 = tpu.matmul %44, %43, %cst_42 {dimension_numbers = #tpu.dot_dimension_numbers<[1], [0], [0], [1], [0, 0, 1, 1], [], []>} : vector<8x64xbf16>, vector<64x256xbf16>, vector<8x256xf32> -> vector<8x256xf32>
    %c0_43 = arith.constant 0 : index
    %c0_44 = arith.constant 0 : index
    %46 = vector.load %arg5[%c0_43, %c0_44] : memref<8x1xf32, #tpu.memory_space<vmem>>, vector<8x1xf32>
    %47 = vector.broadcast %46 : vector<8x1xf32> to vector<8x256xf32>
    %48 = arith.addf %45, %47 : vector<8x256xf32>
    %49 = arith.negf %48 : vector<8x256xf32>
    %50 = math.exp %49 : vector<8x256xf32>
    %cst_45 = arith.constant 1.000000e+00 : f32
    %51 = vector.broadcast %cst_45 : f32 to vector<8x256xf32>
    %52 = arith.addf %51, %50 : vector<8x256xf32>
    %53 = arith.divf %51, %52 : vector<8x256xf32>
    %c0_46 = arith.constant 0 : index
    %c0_47 = arith.constant 0 : index
    %c0_48 = arith.constant 0 : index
    %54 = vector.load %arg7[%c0_46, %c0_47, %c0_48] : memref<1x8x256xf32, #tpu.memory_space<vmem>>, vector<1x8x256xf32>
    %55 = vector.shape_cast %54 : vector<1x8x256xf32> to vector<8x256xf32>
    %56 = vector.shape_cast %53 : vector<8x256xf32> to vector<1x8x256xf32>
    tpu.vector_store %arg7[%c0_46, %c0_47, %c0_48], %56 {strides = array<i32>} : memref<1x8x256xf32, #tpu.memory_space<vmem>>, vector<1x8x256xf32>,
    return
  }
  func.func @transform_0(%arg0: i32) -> (i32, i32, i32) {
    %c0_i32 = arith.constant 0 : i32
    %c0_i32_0 = arith.constant 0 : i32
    %c0_i32_1 = arith.constant 0 : i32
    return %arg0, %c0_i32, %c0_i32_0 : i32, i32, i32
  }
  func.func @transform_1(%arg0: i32) -> (i32, i32, i32) {
    %c0_i32 = arith.constant 0 : i32
    %c0_i32_0 = arith.constant 0 : i32
    %c0_i32_1 = arith.constant 0 : i32
    %c0_i32_2 = arith.constant 0 : i32
    return %c0_i32, %c0_i32_0, %c0_i32_1 : i32, i32, i32
  }
  func.func @transform_2(%arg0: i32) -> (i32, i32) {
    %c0_i32 = arith.constant 0 : i32
    %c0_i32_0 = arith.constant 0 : i32
    %c0_i32_1 = arith.constant 0 : i32
    return %c0_i32, %c0_i32_0 : i32, i32
  }
  func.func @transform_3(%arg0: i32) -> (i32, i32) {
    %c0_i32 = arith.constant 0 : i32
    %c0_i32_0 = arith.constant 0 : i32
    %c0_i32_1 = arith.constant 0 : i32
    return %c0_i32, %c0_i32_0 : i32, i32
  }
  func.func @transform_4(%arg0: i32) -> (i32, i32) {
    %c0_i32 = arith.constant 0 : i32
    %c0_i32_0 = arith.constant 0 : i32
    %c0_i32_1 = arith.constant 0 : i32
    return %c0_i32, %c0_i32_0 : i32, i32
  }
  func.func @transform_5(%arg0: i32) -> (i32, i32) {
    %c0_i32 = arith.constant 0 : i32
    %c0_i32_0 = arith.constant 0 : i32
    %c0_i32_1 = arith.constant 0 : i32
    return %c0_i32, %c0_i32_0 : i32, i32
  }
  func.func @transform_6(%arg0: i32) -> (i32, i32, i32) {
    %c0_i32 = arith.constant 0 : i32
    %c0_i32_0 = arith.constant 0 : i32
    %c0_i32_1 = arith.constant 0 : i32
    return %arg0, %c0_i32, %c0_i32_0 : i32, i32, i32
  }
}

</mosaic_0001>

<llo_original>
// kernel: _segmenter_forward_impl.1
$region0: #{_segmenter_forward_impl.1}
  #allocation0 [shape = 'u32[]', space=smem, size = 0x4, offset = 0x4, fixed_abs, tag = 'smem constant byte address 0x4 - core index']
  #allocation1 [shape = 'u32[144,128]{1,0:T(1,128)}', space=vmem, size = 0x12000, scoped, tag = 'internal scratch']
  #allocation2 [shape = 'bf16[192,512]{1,0:T(16,128)(2,1)}', space=vmem, size = 0x30000, scoped, tag = 'scratch operand']
  #allocation3 [shape = 'f32[64,256]{1,0:T(8,128)}', space=vmem, size = 0x10000, scoped, tag = 'scratch operand']
  %s0 = inlined_call_operand.vmem [shape: f32[2,64,256], index: 0, kind: input, shape index: {}]
  %s1 = inlined_call_operand.vmem [shape: bf16[3,64,192], index: 1, kind: input, shape index: {}]
  %s2 = inlined_call_operand.vmem [shape: f32[64,1], index: 2, kind: input, shape index: {}]
  %s3 = inlined_call_operand.vmem [shape: bf16[8,64], index: 3, kind: input, shape index: {}]
  %s4 = inlined_call_operand.vmem [shape: f32[8,1], index: 4, kind: input, shape index: {}]
  %s5 = inlined_call_operand.vmem [shape: f32[2,256], index: 5, kind: input, shape index: {}]
  %s6 = inlined_call_operand.vmem [shape: f32[2,8,256], index: 6, kind: output, shape index: {}]
  %s7 = sld [smem:[#allocation0]]
  $region57: #{_segmenter_forward_impl.1} parent=0
    _
  %s9 = ssub.s32 1, %s7
  %s10 = scalar_select 0, %s9, %s7
  loop: start=0, step=1, limit=4
  $region2: #{_segmenter_forward_impl.1} parent=0 // loop_pre_header
    _
  $region3: #{_segmenter_forward_impl.1} parent=0 // loop_header
    %s12 = sphi 0, %s16
    %p13 = scmp.ge.s32.totalorder %s12, 4
    %s22 = sphi 0, %s24
    %s25 = sphi 0, %s22
    %s26 = sphi 0, %s25
    %s42 = sphi 0, %s26
    %s46 = sphi 0, %s46
    %s48 = sphi 0, %s46
    %s49 = sphi 0, %s48
    %s63 = sphi 0, %s49
    %s67 = sphi 0, %s67
    %s69 = sphi 0, %s67
    %s70 = sphi 0, %s69
    %s84 = sphi 0, %s70
    %s88 = sphi 0, %s88
    %s90 = sphi 0, %s88
    %s91 = sphi 0, %s90
    %s105 = sphi 0, %s91
    %s109 = sphi 0, %s109
    %s111 = sphi 0, %s109
    %s112 = sphi 0, %s111
    %s126 = sphi 0, %s112
    %s130 = sphi 0, %s130
    %s132 = sphi 0, %s130
    %s133 = sphi 0, %s132
    %s147 = sphi 0, %s133
    %s153 = sphi 0, %s155
    %s156 = sphi 0, %s153
    %s157 = sphi 0, %s156
    %s173 = sphi 0, %s157
  $region4: #{_segmenter_forward_impl.1} parent=0 // loop_header_branch
    %15 = sbr.rel (%p13) target = $region8
  $region5: #{_segmenter_forward_impl.1} parent=0 // loop_body
    %s17 = ssub.s32 %s12, 1
    %s18 = ssub.s32 %s12, 2
    %s19 = sadd.s32 %s12, 1
    %s20 = ssub.s32 %s12, %s19
    %p21 = scmp.eq.s32.totalorder %s20, 0
    %s23 = sadd.s32 %s22, 1
    %s24 = scalar_select %p21, %s22, %s23
    %p27 = pneg %p21
    %p28 = scmp.eq.s32.totalorder %s12, 1
    %p29 = por %p27, %p28
    %p30 = scmp.ne.s32.totalorder %s22, %s25
    %p31 = scmp.eq.s32.totalorder %s12, 0
    %p32 = por %p30, %p31
    %p33 = scmp.ne.s32.totalorder %s22, %s25
    %p34 = scmp.eq.s32.totalorder %s17, 1
    %p35 = por %p33, %p34
    %p36 = scmp.ne.s32.totalorder %s25, %s26
    %p37 = scmp.eq.s32.totalorder %s17, 0
    %p38 = por %p36, %p37
    %p39 = scmp.ne.s32.totalorder %s25, %s26
    %p40 = scmp.eq.s32.totalorder %s18, 1
    %p41 = por %p39, %p40
    %p43 = scmp.ne.s32.totalorder %s26, %s42
    %p44 = scmp.eq.s32.totalorder %s18, 0
    %p45 = por %p43, %p44
    %s47 = sadd.s32 %s46, 1
    %p50 = scmp.eq.s32.totalorder %s12, 1
    %p51 = scmp.ne.s32.totalorder %s46, %s48
    %p52 = scmp.eq.s32.totalorder %s12, 0
    %p53 = por %p51, %p52
    %p54 = scmp.ne.s32.totalorder %s46, %s48
    %p55 = scmp.eq.s32.totalorder %s17, 1
    %p56 = por %p54, %p55
    %p57 = scmp.ne.s32.totalorder %s48, %s49
    %p58 = scmp.eq.s32.totalorder %s17, 0
    %p59 = por %p57, %p58
    %p60 = scmp.ne.s32.totalorder %s48, %s49
    %p61 = scmp.eq.s32.totalorder %s18, 1
    %p62 = por %p60, %p61
    %p64 = scmp.ne.s32.totalorder %s49, %s63
    %p65 = scmp.eq.s32.totalorder %s18, 0
    %p66 = por %p64, %p65
    %s68 = sadd.s32 %s67, 1
    %p71 = scmp.eq.s32.totalorder %s12, 1
    %p72 = scmp.ne.s32.totalorder %s67, %s69
    %p73 = scmp.eq.s32.totalorder %s12, 0
    %p74 = por %p72, %p73
    %p75 = scmp.ne.s32.totalorder %s67, %s69
    %p76 = scmp.eq.s32.totalorder %s17, 1
    %p77 = por %p75, %p76
    %p78 = scmp.ne.s32.totalorder %s69, %s70
    %p79 = scmp.eq.s32.totalorder %s17, 0
    %p80 = por %p78, %p79
    %p81 = scmp.ne.s32.totalorder %s69, %s70
    %p82 = scmp.eq.s32.totalorder %s18, 1
    %p83 = por %p81, %p82
    %p85 = scmp.ne.s32.totalorder %s70, %s84
    %p86 = scmp.eq.s32.totalorder %s18, 0
    %p87 = por %p85, %p86
    %s89 = sadd.s32 %s88, 1
    %p92 = scmp.eq.s32.totalorder %s12, 1
    %p93 = scmp.ne.s32.totalorder %s88, %s90
    %p94 = scmp.eq.s32.totalorder %s12, 0
    %p95 = por %p93, %p94
    %p96 = scmp.ne.s32.totalorder %s88, %s90
    %p97 = scmp.eq.s32.totalorder %s17, 1
    %p98 = por %p96, %p97
    %p99 = scmp.ne.s32.totalorder %s90, %s91
    %p100 = scmp.eq.s32.totalorder %s17, 0
    %p101 = por %p99, %p100
    %p102 = scmp.ne.s32.totalorder %s90, %s91
    %p103 = scmp.eq.s32.totalorder %s18, 1
    %p104 = por %p102, %p103
    %p106 = scmp.ne.s32.totalorder %s91, %s105
    %p107 = scmp.eq.s32.totalorder %s18, 0
    %p108 = por %p106, %p107
    %s110 = sadd.s32 %s109, 1
    %p113 = scmp.eq.s32.totalorder %s12, 1
    %p114 = scmp.ne.s32.totalorder %s109, %s111
    %p115 = scmp.eq.s32.totalorder %s12, 0
    %p116 = por %p114, %p115
    %p117 = scmp.ne.s32.totalorder %s109, %s111
    %p118 = scmp.eq.s32.totalorder %s17, 1
    %p119 = por %p117, %p118
    %p120 = scmp.ne.s32.totalorder %s111, %s112
    %p121 = scmp.eq.s32.totalorder %s17, 0
    %p122 = por %p120, %p121
    %p123 = scmp.ne.s32.totalorder %s111, %s112
    %p124 = scmp.eq.s32.totalorder %s18, 1
    %p125 = por %p123, %p124
    %p127 = scmp.ne.s32.totalorder %s112, %s126
    %p128 = scmp.eq.s32.totalorder %s18, 0
    %p129 = por %p127, %p128
    %s131 = sadd.s32 %s130, 1
    %p134 = scmp.eq.s32.totalorder %s12, 1
    %p135 = scmp.ne.s32.totalorder %s130, %s132
    %p136 = scmp.eq.s32.totalorder %s12, 0
    %p137 = por %p135, %p136
    %p138 = scmp.ne.s32.totalorder %s130, %s132
    %p139 = scmp.eq.s32.totalorder %s17, 1
    %p140 = por %p138, %p139
    %p141 = scmp.ne.s32.totalorder %s132, %s133
    %p142 = scmp.eq.s32.totalorder %s17, 0
    %p143 = por %p141, %p142
    %p144 = scmp.ne.s32.totalorder %s132, %s133
    %p145 = scmp.eq.s32.totalorder %s18, 1
    %p146 = por %p144, %p145
    %p148 = scmp.ne.s32.totalorder %s133, %s147
    %p149 = scmp.eq.s32.totalorder %s18, 0
    %p150 = por %p148, %p149
    %s151 = ssub.s32 %s12, %s19
    %p152 = scmp.eq.s32.totalorder %s151, 0
    %s154 = sadd.s32 %s153, 1
    %s155 = scalar_select %p152, %s153, %s154
    %p158 = pneg %p152
    %p159 = scmp.eq.s32.totalorder %s12, 1
    %p160 = por %p158, %p159
    %p161 = scmp.ne.s32.totalorder %s153, %s156
    %p162 = scmp.eq.s32.totalorder %s12, 0
    %p163 = por %p161, %p162
    %p164 = scmp.ne.s32.totalorder %s153, %s156
    %p165 = scmp.eq.s32.totalorder %s17, 1
    %p166 = por %p164, %p165
    %p167 = scmp.ne.s32.totalorder %s156, %s157
    %p168 = scmp.eq.s32.totalorder %s17, 0
    %p169 = por %p167, %p168
    %p170 = scmp.ne.s32.totalorder %s156, %s157
    %p171 = scmp.eq.s32.totalorder %s18, 1
    %p172 = por %p170, %p171
    %p174 = scmp.ne.s32.totalorder %s157, %s173
    %p175 = scmp.eq.s32.totalorder %s18, 0
    %p176 = por %p174, %p175
    %p177 = scmp.le.s32.totalorder 1, %s12
    %p178 = scmp.lt.s32.totalorder %s12, 3
    %p179 = pnand %p177, %p178
    %p180 = pneg %p179
    // Predicated region
    $region9: #{_segmenter_forward_impl.1} parent=5 // pred_check
      _
    $region10: #{_segmenter_forward_impl.1} parent=5 // pred_check_branch
      %182 = sbr.rel (%p179) target = $region12
    $region11: #{_segmenter_forward_impl.1} parent=5 // pred_region
      %s183 = ssub.s32 %s12, 1
      // Predicated region
      $region13: #{_segmenter_forward_impl.1} parent=11 // pred_check
        %p184 = pneg %p59
      $region14: #{_segmenter_forward_impl.1} parent=11 // pred_check_branch
        %186 = sbr.rel (%p184) target = $region16
      $region15: #{_segmenter_forward_impl.1} parent=11 // pred_region
        _
      $region16: #{_segmenter_forward_impl.1} parent=11 // pred_fallthru
        _
      // Predicated region
      $region17: #{_segmenter_forward_impl.1} parent=11 // pred_check
        %p187 = pneg %p80
      $region18: #{_segmenter_forward_impl.1} parent=11 // pred_check_branch
        %189 = sbr.rel (%p187) target = $region20
      $region19: #{_segmenter_forward_impl.1} parent=11 // pred_region
        _
      $region20: #{_segmenter_forward_impl.1} parent=11 // pred_fallthru
        _
      // Predicated region
      $region21: #{_segmenter_forward_impl.1} parent=11 // pred_check
        %p190 = pneg %p101
      $region22: #{_segmenter_forward_impl.1} parent=11 // pred_check_branch
        %192 = sbr.rel (%p190) target = $region24
      $region23: #{_segmenter_forward_impl.1} parent=11 // pred_region
        _
      $region24: #{_segmenter_forward_impl.1} parent=11 // pred_fallthru
        _
      // Predicated region
      $region25: #{_segmenter_forward_impl.1} parent=11 // pred_check
        %p193 = pneg %p122
      $region26: #{_segmenter_forward_impl.1} parent=11 // pred_check_branch
        %195 = sbr.rel (%p193) target = $region28
      $region27: #{_segmenter_forward_impl.1} parent=11 // pred_region
        _
      $region28: #{_segmenter_forward_impl.1} parent=11 // pred_fallthru
        _
      // Predicated region
      $region29: #{_segmenter_forward_impl.1} parent=11 // pred_check
        %p196 = pneg %p143
      $region30: #{_segmenter_forward_impl.1} parent=11 // pred_check_branch
        %198 = sbr.rel (%p196) target = $region32
      $region31: #{_segmenter_forward_impl.1} parent=11 // pred_region
        _
      $region32: #{_segmenter_forward_impl.1} parent=11 // pred_fallthru
        _
    $region12: #{_segmenter_forward_impl.1} parent=5 // pred_fallthru
      _
    %p199 = scmp.lt.s32.totalorder %s12, 2
    // Predicated region
    $region33: #{_segmenter_forward_impl.1} parent=5 // pred_check
      %p200 = pneg %p199
    $region34: #{_segmenter_forward_impl.1} parent=5 // pred_check_branch
      %202 = sbr.rel (%p200) target = $region36
    $region35: #{_segmenter_forward_impl.1} parent=5 // pred_region
      // Predicated region
      $region37: #{_segmenter_forward_impl.1} parent=35 // pred_check
        %p203 = pneg %p32
      $region38: #{_segmenter_forward_impl.1} parent=35 // pred_check_branch
        %205 = sbr.rel (%p203) target = $region40
      $region39: #{_segmenter_forward_impl.1} parent=35 // pred_region
        %p206 = scmp.lt.s32.totalorder %s12, 1
        %s207 = scalar_select %p206, %s12, 1
        %s208 = smul.addr %s207, 16
        %s209 = smul.addr %s208, 8
        %s210 = scalar_lea.vmem %s0, %s209
      $region40: #{_segmenter_forward_impl.1} parent=35 // pred_fallthru
        _
    $region36: #{_segmenter_forward_impl.1} parent=5 // pred_fallthru
      _
    %p211 = scmp.le.s32.totalorder 1, %s12
    %p212 = scmp.lt.s32.totalorder %s12, 3
    %p213 = pnand %p211, %p212
    %p214 = pneg %p213
    // Predicated region
    $region41: #{_segmenter_forward_impl.1} parent=5 // pred_check
      _
    $region42: #{_segmenter_forward_impl.1} parent=5 // pred_check_branch
      %216 = sbr.rel (%p213) target = $region44
    $region43: #{_segmenter_forward_impl.1} parent=5 // pred_region
      %s217 = ssub.s32 %s12, 1
      %p218 = scmp.lt.s32.totalorder %s17, 1
      %s219 = scalar_select %p218, %s17, 1
      %s220 = smul.addr %s219, 16
      %s221 = smul.addr %s220, 8
      %s222 = scalar_lea.vmem %s0, %s221
      %p223 = pneg %p38
      %p224 = pneg %p35
      %p225 = pneg %p59
      %p226 = pneg %p56
      %p227 = pneg %p80
      %p228 = pneg %p77
      %p229 = pneg %p101
      %p230 = pneg %p98
      %p231 = pneg %p122
      %p232 = pneg %p119
      %p233 = pneg %p143
      %p234 = pneg %p140
      %p235 = pneg %p169
      %p236 = pneg %p166
      %p237 = scmp.lt.s32.totalorder %s17, 1
      %s238 = scalar_select %p237, %s17, 1
      %s239 = smul.addr %s238, 2
      %s240 = smul.addr %s239, 8
      %s241 = scalar_lea.vmem %s6, %s240
      %p242 = scmp.lt.s32.totalorder %s17, 1
      %s243 = scalar_select %p242, %s17, 1
      %s244 = smul.addr %s243, 16
      %s245 = smul.addr %s244, 8
      %s246 = scalar_lea.vmem %s0, %s245
      %p247 = scmp.lt.s32.totalorder %s17, 1
      %s248 = scalar_select %p247, %s17, 1
      %s249 = smul.addr %s248, 2
      %s250 = smul.addr %s249, 8
      %s251 = scalar_lea.vmem %s6, %s250
      %vm253 = vcmask 1048440
      %254 = vst.msk [vmem:[#allocation2] sm:$0xff] %vm253, 0
      %vm255 = vcmask 7168
      %256 = vst.msk [vmem:[#allocation2 + $0x8] sm:$0xff] %vm255, 0
      %257 = vst.msk [vmem:[#allocation2 + $0x20] sm:$0xff] %vm253, 0
      %258 = vst.msk [vmem:[#allocation2 + $0x28] sm:$0xff] %vm255, 0
      %259 = vst.msk [vmem:[#allocation2 + $0x40] sm:$0xff] %vm253, 0
      %260 = vst.msk [vmem:[#allocation2 + $0x48] sm:$0xff] %vm255, 0
      %261 = vst.msk [vmem:[#allocation2 + $0x60] sm:$0xff] %vm253, 0
      %262 = vst.msk [vmem:[#allocation2 + $0x68] sm:$0xff] %vm255, 0
      %263 = vst.msk [vmem:[#allocation2 + $0x80] sm:$0xff] %vm253, 0
      %264 = vst.msk [vmem:[#allocation2 + $0x88] sm:$0xff] %vm255, 0
      %265 = vst.msk [vmem:[#allocation2 + $0xa0] sm:$0xff] %vm253, 0
      %266 = vst.msk [vmem:[#allocation2 + $0xa8] sm:$0xff] %vm255, 0
      %267 = vst.msk [vmem:[#allocation2 + $0xc0] sm:$0xff] %vm253, 0
      %268 = vst.msk [vmem:[#allocation2 + $0xc8] sm:$0xff] %vm255, 0
      %269 = vst.msk [vmem:[#allocation2 + $0xe0] sm:$0xff] %vm253, 0
      %270 = vst.msk [vmem:[#allocation2 + $0xe8] sm:$0xff] %vm255, 0
      %271 = vst.msk [vmem:[#allocation2 + $0x100] sm:$0xff] %vm253, 0
      %272 = vst.msk [vmem:[#allocation2 + $0x108] sm:$0xff] %vm255, 0
      %273 = vst.msk [vmem:[#allocation2 + $0x120] sm:$0xff] %vm253, 0
      %274 = vst.msk [vmem:[#allocation2 + $0x128] sm:$0xff] %vm255, 0
      %275 = vst.msk [vmem:[#allocation2 + $0x140] sm:$0xff] %vm253, 0
      %276 = vst.msk [vmem:[#allocation2 + $0x148] sm:$0xff] %vm255, 0
      %277 = vst.msk [vmem:[#allocation2 + $0x160] sm:$0xff] %vm253, 0
      %278 = vst.msk [vmem:[#allocation2 + $0x168] sm:$0xff] %vm255, 0
      %vm279 = vcmask 1048568
      %280 = vst.msk [vmem:[#allocation2 + $0x10] sm:$0xff] %vm279, 0
      %281 = vst [vmem:[#allocation2 + $0x18] sm:$0xff] 0
      %282 = vst.msk [vmem:[#allocation2 + $0x30] sm:$0xff] %vm279, 0
      %283 = vst [vmem:[#allocation2 + $0x38] sm:$0xff] 0
      %284 = vst.msk [vmem:[#allocation2 + $0x50] sm:$0xff] %vm279, 0
      %285 = vst [vmem:[#allocation2 + $0x58] sm:$0xff] 0
      %286 = vst.msk [vmem:[#allocation2 + $0x70] sm:$0xff] %vm279, 0
      %287 = vst [vmem:[#allocation2 + $0x78] sm:$0xff] 0
      %288 = vst.msk [vmem:[#allocation2 + $0x90] sm:$0xff] %vm279, 0
      %289 = vst [vmem:[#allocation2 + $0x98] sm:$0xff] 0
      %290 = vst.msk [vmem:[#allocation2 + $0xb0] sm:$0xff] %vm279, 0
      %291 = vst [vmem:[#allocation2 + $0xb8] sm:$0xff] 0
      %292 = vst.msk [vmem:[#allocation2 + $0xd0] sm:$0xff] %vm279, 0
      %293 = vst [vmem:[#allocation2 + $0xd8] sm:$0xff] 0
      %294 = vst.msk [vmem:[#allocation2 + $0xf0] sm:$0xff] %vm279, 0
      %295 = vst [vmem:[#allocation2 + $0xf8] sm:$0xff] 0
      %296 = vst.msk [vmem:[#allocation2 + $0x110] sm:$0xff] %vm279, 0
      %297 = vst [vmem:[#allocation2 + $0x118] sm:$0xff] 0
      %298 = vst.msk [vmem:[#allocation2 + $0x130] sm:$0xff] %vm279, 0
      %299 = vst [vmem:[#allocation2 + $0x138] sm:$0xff] 0
      %300 = vst.msk [vmem:[#allocation2 + $0x150] sm:$0xff] %vm279, 0
      %301 = vst [vmem:[#allocation2 + $0x158] sm:$0xff] 0
      %302 = vst.msk [vmem:[#allocation2 + $0x170] sm:$0xff] %vm279, 0
      %303 = vst [vmem:[#allocation2 + $0x178] sm:$0xff] 0
      %v304 = vld [vmem:[%s246] sm:$0xff]
      %v305 = vld [vmem:[%s246 + $0x8] sm:$0xff]
      %v306 = vld [vmem:[%s246 + $0x10] sm:$0xff]
      %v307 = vld [vmem:[%s246 + $0x18] sm:$0xff]
      %v308 = vld [vmem:[%s246 + $0x20] sm:$0xff]
      %v309 = vld [vmem:[%s246 + $0x28] sm:$0xff]
      %v310 = vld [vmem:[%s246 + $0x30] sm:$0xff]
      %v311 = vld [vmem:[%s246 + $0x38] sm:$0xff]
      %v312 = vld [vmem:[%s246 + $0x40] sm:$0xff]
      %v313 = vld [vmem:[%s246 + $0x48] sm:$0xff]
      %v314 = vld [vmem:[%s246 + $0x50] sm:$0xff]
      %v315 = vld [vmem:[%s246 + $0x58] sm:$0xff]
      %v316 = vld [vmem:[%s246 + $0x60] sm:$0xff]
      %v317 = vld [vmem:[%s246 + $0x68] sm:$0xff]
      %v318 = vld [vmem:[%s246 + $0x70] sm:$0xff]
      %v319 = vld [vmem:[%s246 + $0x78] sm:$0xff]
      %v320 = vld [vmem:[%s5] ss:$2 sm:$0x3]
      %v322 = vlaneseq
      %v323 = vshrl.u32 %v322, 7
      %v324 = vsub.s32 0, %v323
      %v325 = vrot.slane %v320, %v324
      %v326 = vlaneseq
      %v327 = vshrl.u32 %v326, 7
      %v328 = vsub.s32 1, %v327
      %v329 = vrot.slane %v320, %v328
      %v332 = vmul.f32 %v304, %v325
      %v333 = vmul.f32 %v305, %v329
      %v334 = vmul.f32 %v306, %v325
      %v335 = vmul.f32 %v307, %v329
      %v336 = vmul.f32 %v308, %v325
      %v337 = vmul.f32 %v309, %v329
      %v338 = vmul.f32 %v310, %v325
      %v339 = vmul.f32 %v311, %v329
      %v340 = vmul.f32 %v312, %v325
      %v341 = vmul.f32 %v313, %v329
      %v342 = vmul.f32 %v314, %v325
      %v343 = vmul.f32 %v315, %v329
      %v344 = vmul.f32 %v316, %v325
      %v345 = vmul.f32 %v317, %v329
      %v346 = vmul.f32 %v318, %v325
      %v347 = vmul.f32 %v319, %v329
      %v348 = vpack.c.bf16 %v334, %v332
      %v349 = vpack.c.bf16 %v335, %v333
      %v350 = vpack.c.bf16 %v338, %v336
      %v351 = vpack.c.bf16 %v339, %v337
      %v352 = vpack.c.bf16 %v342, %v340
      %v353 = vpack.c.bf16 %v343, %v341
      %v354 = vpack.c.bf16 %v346, %v344
      %v355 = vpack.c.bf16 %v347, %v345
      %364 = vrot.lane.b32.xlu0 %v348, 1
      %v365 = vpop.permute.xlu0 %364
      %366 = vrot.lane.b32.xlu0 %v349, 1
      %v367 = vpop.permute.xlu0 %366
      %368 = vrot.lane.b32.xlu0 %v350, 1
      %v369 = vpop.permute.xlu0 %368
      %370 = vrot.lane.b32.xlu0 %v351, 1
      %v371 = vpop.permute.xlu0 %370
      %372 = vrot.lane.b32.xlu0 %v352, 1
      %v373 = vpop.permute.xlu0 %372
      %374 = vrot.lane.b32.xlu0 %v353, 1
      %v375 = vpop.permute.xlu0 %374
      %376 = vrot.lane.b32.xlu0 %v354, 1
      %v377 = vpop.permute.xlu0 %376
      %378 = vrot.lane.b32.xlu0 %v355, 1
      %v379 = vpop.permute.xlu0 %378
      %vm380 = vcmask 7168
      %v381 = vsel %vm380, %v365, %v367
      %v382 = vsel %vm380, %v369, %v371
      %v383 = vsel %vm380, %v373, %v375
      %v384 = vsel %vm380, %v377, %v379
      %vm397 = vcmask 1047560
      %398 = vst.msk [vmem:[#allocation2 + $0x8] sm:$0xff] %vm397, %v365
      %399 = vst [vmem:[#allocation2 + $0x10] sm:$0xff] %v381
      %400 = vst.msk [vmem:[#allocation2 + $0x18] sm:$0xff] %vm255, %v367
      %401 = vst.msk [vmem:[#allocation2 + $0x28] sm:$0xff] %vm397, %v369
      %402 = vst [vmem:[#allocation2 + $0x30] sm:$0xff] %v382
      %403 = vst.msk [vmem:[#allocation2 + $0x38] sm:$0xff] %vm255, %v371
      %404 = vst.msk [vmem:[#allocation2 + $0x48] sm:$0xff] %vm397, %v373
      %405 = vst [vmem:[#allocation2 + $0x50] sm:$0xff] %v383
      %406 = vst.msk [vmem:[#allocation2 + $0x58] sm:$0xff] %vm255, %v375
      %407 = vst.msk [vmem:[#allocation2 + $0x68] sm:$0xff] %vm397, %v377
      %408 = vst [vmem:[#allocation2 + $0x70] sm:$0xff] %v384
      %409 = vst.msk [vmem:[#allocation2 + $0x78] sm:$0xff] %vm255, %v379
      %v410 = vpack.c.bf16 %v306, %v304
      %v411 = vpack.c.bf16 %v307, %v305
      %v412 = vpack.c.bf16 %v310, %v308
      %v413 = vpack.c.bf16 %v311, %v309
      %v414 = vpack.c.bf16 %v314, %v312
      %v415 = vpack.c.bf16 %v315, %v313
      %v416 = vpack.c.bf16 %v318, %v316
      %v417 = vpack.c.bf16 %v319, %v317
      %418 = vst [vmem:[#allocation2 + $0x88] sm:$0xff] %v410
      %419 = vst [vmem:[#allocation2 + $0x90] sm:$0xff] %v411
      %420 = vst [vmem:[#allocation2 + $0xa8] sm:$0xff] %v412
      %421 = vst [vmem:[#allocation2 + $0xb0] sm:$0xff] %v413
      %422 = vst [vmem:[#allocation2 + $0xc8] sm:$0xff] %v414
      %423 = vst [vmem:[#allocation2 + $0xd0] sm:$0xff] %v415
      %424 = vst [vmem:[#allocation2 + $0xe8] sm:$0xff] %v416
      %425 = vst [vmem:[#allocation2 + $0xf0] sm:$0xff] %v417
      %s426 = scalar_lea.vmem %s5, 1
      %v427 = vld [vmem:[%s426] ss:$2 sm:$0x3]
      %v429 = vlaneseq
      %v430 = vshrl.u32 %v429, 7
      %v431 = vsub.s32 0, %v430
      %v432 = vrot.slane %v427, %v431
      %v433 = vlaneseq
      %v434 = vshrl.u32 %v433, 7
      %v435 = vsub.s32 1, %v434
      %v436 = vrot.slane %v427, %v435
      %v439 = vmul.f32 %v304, %v432
      %v440 = vmul.f32 %v305, %v436
      %v441 = vmul.f32 %v306, %v432
      %v442 = vmul.f32 %v307, %v436
      %v443 = vmul.f32 %v308, %v432
      %v444 = vmul.f32 %v309, %v436
      %v445 = vmul.f32 %v310, %v432
      %v446 = vmul.f32 %v311, %v436
      %v447 = vmul.f32 %v312, %v432
      %v448 = vmul.f32 %v313, %v436
      %v449 = vmul.f32 %v314, %v432
      %v450 = vmul.f32 %v315, %v436
      %v451 = vmul.f32 %v316, %v432
      %v452 = vmul.f32 %v317, %v436
      %v453 = vmul.f32 %v318, %v432
      %v454 = vmul.f32 %v319, %v436
      %v455 = vpack.c.bf16 %v441, %v439
      %v456 = vpack.c.bf16 %v442, %v440
      %v457 = vpack.c.bf16 %v445, %v443
      %v458 = vpack.c.bf16 %v446, %v444
      %v459 = vpack.c.bf16 %v449, %v447
      %v460 = vpack.c.bf16 %v450, %v448
      %v461 = vpack.c.bf16 %v453, %v451
      %v462 = vpack.c.bf16 %v454, %v452
      %471 = vrot.lane.b32.xlu0 %v455, 127
      %v472 = vpop.permute.xlu0 %471
      %473 = vrot.lane.b32.xlu0 %v456, 127
      %v474 = vpop.permute.xlu0 %473
      %475 = vrot.lane.b32.xlu0 %v457, 127
      %v476 = vpop.permute.xlu0 %475
      %477 = vrot.lane.b32.xlu0 %v458, 127
      %v478 = vpop.permute.xlu0 %477
      %479 = vrot.lane.b32.xlu0 %v459, 127
      %v480 = vpop.permute.xlu0 %479
      %481 = vrot.lane.b32.xlu0 %v460, 127
      %v482 = vpop.permute.xlu0 %481
      %483 = vrot.lane.b32.xlu0 %v461, 127
      %v484 = vpop.permute.xlu0 %483
      %485 = vrot.lane.b32.xlu0 %v462, 127
      %v486 = vpop.permute.xlu0 %485
      %vm487 = vcmask 1039360
      %v488 = vsel %vm487, %v472, %v474
      %v489 = vsel %vm487, %v476, %v478
      %v490 = vsel %vm487, %v480, %v482
      %v491 = vsel %vm487, %v484, %v486
      %504 = vst.msk [vmem:[#allocation2 + $0x100] sm:$0xff] %vm279, %v472
      %505 = vst [vmem:[#allocation2 + $0x108] sm:$0xff] %v488
      %vm506 = vcmask 1039360
      %507 = vst.msk [vmem:[#allocation2 + $0x110] sm:$0xff] %vm506, %v474
      %508 = vst.msk [vmem:[#allocation2 + $0x120] sm:$0xff] %vm279, %v476
      %509 = vst [vmem:[#allocation2 + $0x128] sm:$0xff] %v489
      %510 = vst.msk [vmem:[#allocation2 + $0x130] sm:$0xff] %vm506, %v478
      %511 = vst.msk [vmem:[#allocation2 + $0x140] sm:$0xff] %vm279, %v480
      %512 = vst [vmem:[#allocation2 + $0x148] sm:$0xff] %v490
      %513 = vst.msk [vmem:[#allocation2 + $0x150] sm:$0xff] %vm506, %v482
      %514 = vst.msk [vmem:[#allocation2 + $0x160] sm:$0xff] %vm279, %v484
      %515 = vst [vmem:[#allocation2 + $0x168] sm:$0xff] %v491
      %516 = vst.msk [vmem:[#allocation2 + $0x170] sm:$0xff] %vm506, %v486
      %v517 = vld [vmem:[%s1] sm:$0xff]
      %v518 = vld [vmem:[%s1 + $0x8] sm:$0xff]
      %v519 = vld [vmem:[%s1 + $0x10] sm:$0xff]
      %v520 = vld [vmem:[%s1 + $0x18] sm:$0xff]
      %v521 = vld [vmem:[%s1 + $0x20] sm:$0xff]
      %v522 = vld [vmem:[%s1 + $0x28] sm:$0xff]
      %v523 = vld [vmem:[%s1 + $0x30] sm:$0xff]
      %v524 = vld [vmem:[%s1 + $0x38] sm:$0xff]
      %v525 = vld [vmem:[#allocation2] sm:$0xff]
      %v526 = vld [vmem:[#allocation2 + $0x8] sm:$0xff]
      %v527 = vld [vmem:[#allocation2 + $0x10] sm:$0xff]
      %v528 = vld [vmem:[#allocation2 + $0x20] sm:$0xff]
      %v529 = vld [vmem:[#allocation2 + $0x28] sm:$0xff]
      %v530 = vld [vmem:[#allocation2 + $0x30] sm:$0xff]
      %v531 = vld [vmem:[#allocation2 + $0x40] sm:$0xff]
      %v532 = vld [vmem:[#allocation2 + $0x48] sm:$0xff]
      %v533 = vld [vmem:[#allocation2 + $0x50] sm:$0xff]
      %v534 = vld [vmem:[#allocation2 + $0x60] sm:$0xff]
      %v535 = vld [vmem:[#allocation2 + $0x68] sm:$0xff]
      %v536 = vld [vmem:[#allocation2 + $0x70] sm:$0xff]
      %v537 = vld [vmem:[#allocation2 + $0x80] sm:$0xff]
      %v538 = vld [vmem:[#allocation2 + $0x88] sm:$0xff]
      %v539 = vld [vmem:[#allocation2 + $0x90] sm:$0xff]
      %v540 = vld [vmem:[#allocation2 + $0xa0] sm:$0xff]
      %v541 = vld [vmem:[#allocation2 + $0xa8] sm:$0xff]
      %v542 = vld [vmem:[#allocation2 + $0xb0] sm:$0xff]
      %v543 = vld [vmem:[#allocation2 + $0xc0] sm:$0xff]
      %v544 = vld [vmem:[#allocation2 + $0xc8] sm:$0xff]
      %v545 = vld [vmem:[#allocation2 + $0xd0] sm:$0xff]
      %v546 = vld [vmem:[#allocation2 + $0xe0] sm:$0xff]
      %v547 = vld [vmem:[#allocation2 + $0xe8] sm:$0xff]
      %v548 = vld [vmem:[#allocation2 + $0xf0] sm:$0xff]
      %v549 = vld [vmem:[#allocation2 + $0x100] sm:$0xff]
      %v550 = vld [vmem:[#allocation2 + $0x108] sm:$0xff]
      %v551 = vld [vmem:[#allocation2 + $0x110] sm:$0xff]
      %v552 = vld [vmem:[#allocation2 + $0x120] sm:$0xff]
      %v553 = vld [vmem:[#allocation2 + $0x128] sm:$0xff]
      %v554 = vld [vmem:[#allocation2 + $0x130] sm:$0xff]
      %v555 = vld [vmem:[#allocation2 + $0x140] sm:$0xff]
      %v556 = vld [vmem:[#allocation2 + $0x148] sm:$0xff]
      %v557 = vld [vmem:[#allocation2 + $0x150] sm:$0xff]
      %v558 = vld [vmem:[#allocation2 + $0x160] sm:$0xff]
      %v559 = vld [vmem:[#allocation2 + $0x168] sm:$0xff]
      %v560 = vld [vmem:[#allocation2 + $0x170] sm:$0xff]
      %v569 = vunpack.c.l.b16 %v517
      %v570 = vunpack.c.h.b16 %v517
      %v571 = vunpack.c.l.b16 %v518
      %v572 = vunpack.c.h.b16 %v518
      %v573 = vunpack.c.l.b16 %v519
      %v574 = vunpack.c.h.b16 %v519
      %v575 = vunpack.c.l.b16 %v520
      %v576 = vunpack.c.h.b16 %v520
      %v577 = vunpack.c.l.b16 %v521
      %v578 = vunpack.c.h.b16 %v521
      %v579 = vunpack.c.l.b16 %v522
      %v580 = vunpack.c.h.b16 %v522
      %v581 = vunpack.c.l.b16 %v523
      %v582 = vunpack.c.h.b16 %v523
      %v583 = vunpack.c.l.b16 %v524
      %v584 = vunpack.c.h.b16 %v524
      %v585 = vpack.c.b16 %v571, %v569
      %v586 = vpack.c.b16 %v572, %v570
      %v587 = vpack.c.b16 %v575, %v573
      %v588 = vpack.c.b16 %v576, %v574
      %v589 = vpack.c.b16 %v579, %v577
      %v590 = vpack.c.b16 %v580, %v578
      %v591 = vpack.c.b16 %v583, %v581
      %v592 = vpack.c.b16 %v584, %v582
      %633 = vrot.lane.b32.xlu0 %v525, 16
      %v634 = vpop.permute.xlu0 %633
      %635 = vrot.lane.b32.xlu0 %v526, 16
      %v636 = vpop.permute.xlu0 %635
      %637 = vrot.lane.b32.xlu0 %v527, 16
      %v638 = vpop.permute.xlu0 %637
      %639 = vrot.lane.b32.xlu0 %v528, 16
      %v640 = vpop.permute.xlu0 %639
      %641 = vrot.lane.b32.xlu0 %v529, 16
      %v642 = vpop.permute.xlu0 %641
      %643 = vrot.lane.b32.xlu0 %v530, 16
      %v644 = vpop.permute.xlu0 %643
      %645 = vrot.lane.b32.xlu0 %v531, 16
      %v646 = vpop.permute.xlu0 %645
      %647 = vrot.lane.b32.xlu0 %v532, 16
      %v648 = vpop.permute.xlu0 %647
      %649 = vrot.lane.b32.xlu0 %v533, 16
      %v650 = vpop.permute.xlu0 %649
      %651 = vrot.lane.b32.xlu0 %v534, 16
      %v652 = vpop.permute.xlu0 %651
      %653 = vrot.lane.b32.xlu0 %v535, 16
      %v654 = vpop.permute.xlu0 %653
      %655 = vrot.lane.b32.xlu0 %v536, 16
      %v656 = vpop.permute.xlu0 %655
      %657 = vrot.lane.b32.xlu0 %v537, 16
      %v658 = vpop.permute.xlu0 %657
      %659 = vrot.lane.b32.xlu0 %v538, 16
      %v660 = vpop.permute.xlu0 %659
      %661 = vrot.lane.b32.xlu0 %v539, 16
      %v662 = vpop.permute.xlu0 %661
      %663 = vrot.lane.b32.xlu0 %v540, 16
      %v664 = vpop.permute.xlu0 %663
      %665 = vrot.lane.b32.xlu0 %v541, 16
      %v666 = vpop.permute.xlu0 %665
      %667 = vrot.lane.b32.xlu0 %v542, 16
      %v668 = vpop.permute.xlu0 %667
      %669 = vrot.lane.b32.xlu0 %v543, 16
      %v670 = vpop.permute.xlu0 %669
      %671 = vrot.lane.b32.xlu0 %v544, 16
      %v672 = vpop.permute.xlu0 %671
      %673 = vrot.lane.b32.xlu0 %v545, 16
      %v674 = vpop.permute.xlu0 %673
      %675 = vrot.lane.b32.xlu0 %v546, 16
      %v676 = vpop.permute.xlu0 %675
      %677 = vrot.lane.b32.xlu0 %v547, 16
      %v678 = vpop.permute.xlu0 %677
      %679 = vrot.lane.b32.xlu0 %v548, 16
      %v680 = vpop.permute.xlu0 %679
      %681 = vrot.lane.b32.xlu0 %v549, 16
      %v682 = vpop.permute.xlu0 %681
      %683 = vrot.lane.b32.xlu0 %v550, 16
      %v684 = vpop.permute.xlu0 %683
      %685 = vrot.lane.b32.xlu0 %v551, 16
      %v686 = vpop.permute.xlu0 %685
      %687 = vrot.lane.b32.xlu0 %v552, 16
      %v688 = vpop.permute.xlu0 %687
      %689 = vrot.lane.b32.xlu0 %v553, 16
      %v690 = vpop.permute.xlu0 %689
      %691 = vrot.lane.b32.xlu0 %v554, 16
      %v692 = vpop.permute.xlu0 %691
      %693 = vrot.lane.b32.xlu0 %v555, 16
      %v694 = vpop.permute.xlu0 %693
      %695 = vrot.lane.b32.xlu0 %v556, 16
      %v696 = vpop.permute.xlu0 %695
      %697 = vrot.lane.b32.xlu0 %v557, 16
      %v698 = vpop.permute.xlu0 %697
      %699 = vrot.lane.b32.xlu0 %v558, 16
      %v700 = vpop.permute.xlu0 %699
      %701 = vrot.lane.b32.xlu0 %v559, 16
      %v702 = vpop.permute.xlu0 %701
      %703 = vrot.lane.b32.xlu0 %v560, 16
      %v704 = vpop.permute.xlu0 %703
      %vm705 = vcmask 130048
      %v706 = vsel %vm705, %v634, %v636
      %v707 = vsel %vm705, %v636, %v638
      %v708 = vsel %vm705, %v640, %v642
      %v709 = vsel %vm705, %v642, %v644
      %v710 = vsel %vm705, %v646, %v648
      %v711 = vsel %vm705, %v648, %v650
      %v712 = vsel %vm705, %v652, %v654
      %v713 = vsel %vm705, %v654, %v656
      %v714 = vsel %vm705, %v658, %v660
      %v715 = vsel %vm705, %v660, %v662
      %v716 = vsel %vm705, %v664, %v666
      %v717 = vsel %vm705, %v666, %v668
      %v718 = vsel %vm705, %v670, %v672
      %v719 = vsel %vm705, %v672, %v674
      %v720 = vsel %vm705, %v676, %v678
      %v721 = vsel %vm705, %v678, %v680
      %v722 = vsel %vm705, %v682, %v684
      %v723 = vsel %vm705, %v684, %v686
      %v724 = vsel %vm705, %v688, %v690
      %v725 = vsel %vm705, %v690, %v692
      %v726 = vsel %vm705, %v694, %v696
      %v727 = vsel %vm705, %v696, %v698
      %v728 = vsel %vm705, %v700, %v702
      %v729 = vsel %vm705, %v702, %v704
      %vm754 = vcmask 523264
      %v756 = vsel %vm754, %v586, 0
      %v759 = vsel %vm754, %v588, 0
      %v762 = vsel %vm754, %v590, 0
      %v765 = vsel %vm754, %v592, 0
      %767 = vmatprep.subr.bf16.mxu0 %v707
      %768 = vmatpush1.bf16.msra.mxu0 %v706
      %769 = vmatprep.subr.bf16.mxu0 %v709
      %770 = vmatpush1.bf16.msra.mxu0 %v708
      %771 = vmatprep.subr.bf16.mxu0 %v711
      %772 = vmatpush1.bf16.msra.mxu0 %v710
      %773 = vmatprep.subr.bf16.mxu0 %v713
      %774 = vmatpush1.bf16.msra.mxu0 %v712
      %775 = vmatprep.subr.bf16.mxu0 %v715
      %776 = vmatpush1.bf16.msra.mxu0 %v714
      %777 = vmatprep.subr.bf16.mxu0 %v717
      %778 = vmatpush1.bf16.msra.mxu0 %v716
      %779 = vmatprep.subr.bf16.mxu0 %v719
      %780 = vmatpush1.bf16.msra.mxu0 %v718
      %781 = vmatprep.subr.bf16.mxu0 %v721
      %782 = vmatpush1.bf16.msra.mxu0 %v720
      %783 = vmatprep.subr.bf16.mxu0 %v723
      %784 = vmatpush1.bf16.msra.mxu0 %v722
      %785 = vmatprep.subr.bf16.mxu0 %v725
      %786 = vmatpush1.bf16.msra.mxu0 %v724
      %787 = vmatprep.subr.bf16.mxu0 %v727
      %788 = vmatpush1.bf16.msra.mxu0 %v726
      %789 = vmatprep.subr.bf16.mxu0 %v729
      %790 = vmatpush1.bf16.msra.mxu0 %v728
      %791 = vmatprep.subr.bf16.mxu0 0
      %792 = vmatpush1.bf16.msra.mxu0 0
      %793 = vmatprep.subr.bf16.mxu0 0
      %794 = vmatpush1.bf16.msra.mxu0 0
      %795 = vmatprep.subr.bf16.mxu0 0
      %796 = vmatpush1.bf16.msra.mxu0 0
      %797 = vmatprep.subr.bf16.mxu0 0
      %798 = vmatpush1.bf16.msra.mxu0 0
      %799 = vmatprep.mubr.bf16.mxu0 %v756
      %800 = vmatmul.mubr.bf16.gmra.mrb[0].mxu0 %v585
      %v801 = vpop.f32.mrb[0].mxu0
      %v802 = vadd.f32 0.0, %v801
      %v803 = vpop.f32.mrb[0].mxu0
      %v804 = vadd.f32 0.0, %v803
      %v805 = vpop.f32.mrb[0].mxu0
      %v806 = vadd.f32 0.0, %v805
      %v807 = vpop.f32.mrb[0].mxu0
      %v808 = vadd.f32 0.0, %v807
      %809 = vmatprep.mubr.bf16.mxu0 %v759
      %810 = vmatmul.mubr.bf16.gmra.mrb[0].mxu0 %v587
      %v811 = vpop.f32.mrb[0].mxu0
      %v812 = vadd.f32 0.0, %v811
      %v813 = vpop.f32.mrb[0].mxu0
      %v814 = vadd.f32 0.0, %v813
      %v815 = vpop.f32.mrb[0].mxu0
      %v816 = vadd.f32 0.0, %v815
      %v817 = vpop.f32.mrb[0].mxu0
      %v818 = vadd.f32 0.0, %v817
      %819 = vmatprep.mubr.bf16.mxu0 %v762
      %820 = vmatmul.mubr.bf16.gmra.mrb[0].mxu0 %v589
      %v821 = vpop.f32.mrb[0].mxu0
      %v822 = vadd.f32 0.0, %v821
      %v823 = vpop.f32.mrb[0].mxu0
      %v824 = vadd.f32 0.0, %v823
      %v825 = vpop.f32.mrb[0].mxu0
      %v826 = vadd.f32 0.0, %v825
      %v827 = vpop.f32.mrb[0].mxu0
      %v828 = vadd.f32 0.0, %v827
      %829 = vmatprep.mubr.bf16.mxu0 %v765
      %830 = vmatmul.mubr.bf16.gmra.mrb[0].mxu0 %v591
      %v831 = vpop.f32.mrb[0].mxu0
      %v832 = vadd.f32 0.0, %v831
      %v833 = vpop.f32.mrb[0].mxu0
      %v834 = vadd.f32 0.0, %v833
      %v835 = vpop.f32.mrb[0].mxu0
      %v836 = vadd.f32 0.0, %v835
      %v837 = vpop.f32.mrb[0].mxu0
      %v838 = vadd.f32 0.0, %v837
      %839 = vdwg.mxu0
      %840 = vst [vmem:[#allocation3] sm:$0xff] %v802
      %841 = vst [vmem:[#allocation3 + $0x8] sm:$0xff] %v804
      %842 = vst [vmem:[#allocation3 + $0x10] sm:$0xff] %v806
      %843 = vst [vmem:[#allocation3 + $0x18] sm:$0xff] %v808
      %844 = vst [vmem:[#allocation3 + $0x20] sm:$0xff] %v812
      %845 = vst [vmem:[#allocation3 + $0x28] sm:$0xff] %v814
      %846 = vst [vmem:[#allocation3 + $0x30] sm:$0xff] %v816
      %847 = vst [vmem:[#allocation3 + $0x38] sm:$0xff] %v818
      %848 = vst [vmem:[#allocation3 + $0x40] sm:$0xff] %v822
      %849 = vst [vmem:[#allocation3 + $0x48] sm:$0xff] %v824
      %850 = vst [vmem:[#allocation3 + $0x50] sm:$0xff] %v826
      %851 = vst [vmem:[#allocation3 + $0x58] sm:$0xff] %v828
      %852 = vst [vmem:[#allocation3 + $0x60] sm:$0xff] %v832
      %853 = vst [vmem:[#allocation3 + $0x68] sm:$0xff] %v834
      %854 = vst [vmem:[#allocation3 + $0x70] sm:$0xff] %v836
      %855 = vst [vmem:[#allocation3 + $0x78] sm:$0xff] %v838
      %v856 = vld [vmem:[#allocation3] sm:$0xff]
      %v857 = vld [vmem:[#allocation3 + $0x8] sm:$0xff]
      %v858 = vld [vmem:[#allocation3 + $0x10] sm:$0xff]
      %v859 = vld [vmem:[#allocation3 + $0x18] sm:$0xff]
      %v860 = vld [vmem:[#allocation3 + $0x20] sm:$0xff]
      %v861 = vld [vmem:[#allocation3 + $0x28] sm:$0xff]
      %v862 = vld [vmem:[#allocation3 + $0x30] sm:$0xff]
      %v863 = vld [vmem:[#allocation3 + $0x38] sm:$0xff]
      %v864 = vld [vmem:[#allocation3 + $0x40] sm:$0xff]
      %v865 = vld [vmem:[#allocation3 + $0x48] sm:$0xff]
      %v866 = vld [vmem:[#allocation3 + $0x50] sm:$0xff]
      %v867 = vld [vmem:[#allocation3 + $0x58] sm:$0xff]
      %v868 = vld [vmem:[#allocation3 + $0x60] sm:$0xff]
      %v869 = vld [vmem:[#allocation3 + $0x68] sm:$0xff]
      %v870 = vld [vmem:[#allocation3 + $0x70] sm:$0xff]
      %v871 = vld [vmem:[#allocation3 + $0x78] sm:$0xff]
      %s872 = scalar_lea.vmem %s1, 64
      %v873 = vld [vmem:[%s872] sm:$0xff]
      %v874 = vld [vmem:[%s872 + $0x8] sm:$0xff]
      %v875 = vld [vmem:[%s872 + $0x10] sm:$0xff]
      %v876 = vld [vmem:[%s872 + $0x18] sm:$0xff]
      %v877 = vld [vmem:[%s872 + $0x20] sm:$0xff]
      %v878 = vld [vmem:[%s872 + $0x28] sm:$0xff]
      %v879 = vld [vmem:[%s872 + $0x30] sm:$0xff]
      %v880 = vld [vmem:[%s872 + $0x38] sm:$0xff]
      %v881 = vld [vmem:[#allocation2 + $0x8] sm:$0xff]
      %v882 = vld [vmem:[#allocation2 + $0x10] sm:$0xff]
      %v883 = vld [vmem:[#allocation2 + $0x28] sm:$0xff]
      %v884 = vld [vmem:[#allocation2 + $0x30] sm:$0xff]
      %v885 = vld [vmem:[#allocation2 + $0x48] sm:$0xff]
      %v886 = vld [vmem:[#allocation2 + $0x50] sm:$0xff]
      %v887 = vld [vmem:[#allocation2 + $0x68] sm:$0xff]
      %v888 = vld [vmem:[#allocation2 + $0x70] sm:$0xff]
      %v889 = vld [vmem:[#allocation2 + $0x88] sm:$0xff]
      %v890 = vld [vmem:[#allocation2 + $0x90] sm:$0xff]
      %v891 = vld [vmem:[#allocation2 + $0xa8] sm:$0xff]
      %v892 = vld [vmem:[#allocation2 + $0xb0] sm:$0xff]
      %v893 = vld [vmem:[#allocation2 + $0xc8] sm:$0xff]
      %v894 = vld [vmem:[#allocation2 + $0xd0] sm:$0xff]
      %v895 = vld [vmem:[#allocation2 + $0xe8] sm:$0xff]
      %v896 = vld [vmem:[#allocation2 + $0xf0] sm:$0xff]
      %v897 = vld [vmem:[#allocation2 + $0x108] sm:$0xff]
      %v898 = vld [vmem:[#allocation2 + $0x110] sm:$0xff]
      %v899 = vld [vmem:[#allocation2 + $0x128] sm:$0xff]
      %v900 = vld [vmem:[#allocation2 + $0x130] sm:$0xff]
      %v901 = vld [vmem:[#allocation2 + $0x148] sm:$0xff]
      %v902 = vld [vmem:[#allocation2 + $0x150] sm:$0xff]
      %v903 = vld [vmem:[#allocation2 + $0x168] sm:$0xff]
      %v904 = vld [vmem:[#allocation2 + $0x170] sm:$0xff]
      %v913 = vunpack.c.l.b16 %v873
      %v914 = vunpack.c.h.b16 %v873
      %v915 = vunpack.c.l.b16 %v874
      %v916 = vunpack.c.h.b16 %v874
      %v917 = vunpack.c.l.b16 %v875
      %v918 = vunpack.c.h.b16 %v875
      %v919 = vunpack.c.l.b16 %v876
      %v920 = vunpack.c.h.b16 %v876
      %v921 = vunpack.c.l.b16 %v877
      %v922 = vunpack.c.h.b16 %v877
      %v923 = vunpack.c.l.b16 %v878
      %v924 = vunpack.c.h.b16 %v878
      %v925 = vunpack.c.l.b16 %v879
      %v926 = vunpack.c.h.b16 %v879
      %v927 = vunpack.c.l.b16 %v880
      %v928 = vunpack.c.h.b16 %v880
      %v929 = vpack.c.b16 %v915, %v913
      %v930 = vpack.c.b16 %v916, %v914
      %v931 = vpack.c.b16 %v919, %v917
      %v932 = vpack.c.b16 %v920, %v918
      %v933 = vpack.c.b16 %v923, %v921
      %v934 = vpack.c.b16 %v924, %v922
      %v935 = vpack.c.b16 %v927, %v925
      %v936 = vpack.c.b16 %v928, %v926
      %v942 = vsel %vm754, %v930, 0
      %v945 = vsel %vm754, %v932, 0
      %v948 = vsel %vm754, %v934, 0
      %v951 = vsel %vm754, %v936, 0
      %953 = vmatprep.subr.bf16.mxu0 %v882
      %954 = vmatpush1.bf16.msra.mxu0 %v881
      %955 = vmatprep.subr.bf16.mxu0 %v884
      %956 = vmatpush1.bf16.msra.mxu0 %v883
      %957 = vmatprep.subr.bf16.mxu0 %v886
      %958 = vmatpush1.bf16.msra.mxu0 %v885
      %959 = vmatprep.subr.bf16.mxu0 %v888
      %960 = vmatpush1.bf16.msra.mxu0 %v887
      %961 = vmatprep.subr.bf16.mxu0 %v890
      %962 = vmatpush1.bf16.msra.mxu0 %v889
      %963 = vmatprep.subr.bf16.mxu0 %v892
      %964 = vmatpush1.bf16.msra.mxu0 %v891
      %965 = vmatprep.subr.bf16.mxu0 %v894
      %966 = vmatpush1.bf16.msra.mxu0 %v893
      %967 = vmatprep.subr.bf16.mxu0 %v896
      %968 = vmatpush1.bf16.msra.mxu0 %v895
      %969 = vmatprep.subr.bf16.mxu0 %v898
      %970 = vmatpush1.bf16.msra.mxu0 %v897
      %971 = vmatprep.subr.bf16.mxu0 %v900
      %972 = vmatpush1.bf16.msra.mxu0 %v899
      %973 = vmatprep.subr.bf16.mxu0 %v902
      %974 = vmatpush1.bf16.msra.mxu0 %v901
      %975 = vmatprep.subr.bf16.mxu0 %v904
      %976 = vmatpush1.bf16.msra.mxu0 %v903
      %977 = vmatprep.subr.bf16.mxu0 0
      %978 = vmatpush1.bf16.msra.mxu0 0
      %979 = vmatprep.subr.bf16.mxu0 0
      %980 = vmatpush1.bf16.msra.mxu0 0
      %981 = vmatprep.subr.bf16.mxu0 0
      %982 = vmatpush1.bf16.msra.mxu0 0
      %983 = vmatprep.subr.bf16.mxu0 0
      %984 = vmatpush1.bf16.msra.mxu0 0
      %985 = vmatprep.mubr.bf16.mxu0 %v942
      %986 = vmatmul.mubr.bf16.gmra.mrb[0].mxu0 %v929
      %v987 = vpop.f32.mrb[0].mxu0
      %v988 = vadd.f32 0.0, %v987
      %v989 = vpop.f32.mrb[0].mxu0
      %v990 = vadd.f32 0.0, %v989
      %v991 = vpop.f32.mrb[0].mxu0
      %v992 = vadd.f32 0.0, %v991
      %v993 = vpop.f32.mrb[0].mxu0
      %v994 = vadd.f32 0.0, %v993
      %995 = vmatprep.mubr.bf16.mxu0 %v945
      %996 = vmatmul.mubr.bf16.gmra.mrb[0].mxu0 %v931
      %v997 = vpop.f32.mrb[0].mxu0
      %v998 = vadd.f32 0.0, %v997
      %v999 = vpop.f32.mrb[0].mxu0
      %v1000 = vadd.f32 0.0, %v999
      %v1001 = vpop.f32.mrb[0].mxu0
      %v1002 = vadd.f32 0.0, %v1001
      %v1003 = vpop.f32.mrb[0].mxu0
      %v1004 = vadd.f32 0.0, %v1003
      %1005 = vmatprep.mubr.bf16.mxu0 %v948
      %1006 = vmatmul.mubr.bf16.gmra.mrb[0].mxu0 %v933
      %v1007 = vpop.f32.mrb[0].mxu0
      %v1008 = vadd.f32 0.0, %v1007
      %v1009 = vpop.f32.mrb[0].mxu0
      %v1010 = vadd.f32 0.0, %v1009
      %v1011 = vpop.f32.mrb[0].mxu0
      %v1012 = vadd.f32 0.0, %v1011
      %v1013 = vpop.f32.mrb[0].mxu0
      %v1014 = vadd.f32 0.0, %v1013
      %1015 = vmatprep.mubr.bf16.mxu0 %v951
      %1016 = vmatmul.mubr.bf16.gmra.mrb[0].mxu0 %v935
      %v1017 = vpop.f32.mrb[0].mxu0
      %v1018 = vadd.f32 0.0, %v1017
      %v1019 = vpop.f32.mrb[0].mxu0
      %v1020 = vadd.f32 0.0, %v1019
      %v1021 = vpop.f32.mrb[0].mxu0
      %v1022 = vadd.f32 0.0, %v1021
      %v1023 = vpop.f32.mrb[0].mxu0
      %v1024 = vadd.f32 0.0, %v1023
      %1025 = vdwg.mxu0
      %v1026 = vadd.f32 %v856, %v988
      %v1027 = vadd.f32 %v857, %v990
      %v1028 = vadd.f32 %v858, %v992
      %v1029 = vadd.f32 %v859, %v994
      %v1030 = vadd.f32 %v860, %v998
      %v1031 = vadd.f32 %v861, %v1000
      %v1032 = vadd.f32 %v862, %v1002
      %v1033 = vadd.f32 %v863, %v1004
      %v1034 = vadd.f32 %v864, %v1008
      %v1035 = vadd.f32 %v865, %v1010
      %v1036 = vadd.f32 %v866, %v1012
      %v1037 = vadd.f32 %v867, %v1014
      %v1038 = vadd.f32 %v868, %v1018
      %v1039 = vadd.f32 %v869, %v1020
      %v1040 = vadd.f32 %v870, %v1022
      %v1041 = vadd.f32 %v871, %v1024
      %1042 = vst [vmem:[#allocation3] sm:$0xff] %v1026
      %1043 = vst [vmem:[#allocation3 + $0x8] sm:$0xff] %v1027
      %1044 = vst [vmem:[#allocation3 + $0x10] sm:$0xff] %v1028
      %1045 = vst [vmem:[#allocation3 + $0x18] sm:$0xff] %v1029
      %1046 = vst [vmem:[#allocation3 + $0x20] sm:$0xff] %v1030
      %1047 = vst [vmem:[#allocation3 + $0x28] sm:$0xff] %v1031
      %1048 = vst [vmem:[#allocation3 + $0x30] sm:$0xff] %v1032
      %1049 = vst [vmem:[#allocation3 + $0x38] sm:$0xff] %v1033
      %1050 = vst [vmem:[#allocation3 + $0x40] sm:$0xff] %v1034
      %1051 = vst [vmem:[#allocation3 + $0x48] sm:$0xff] %v1035
      %1052 = vst [vmem:[#allocation3 + $0x50] sm:$0xff] %v1036
      %1053 = vst [vmem:[#allocation3 + $0x58] sm:$0xff] %v1037
      %1054 = vst [vmem:[#allocation3 + $0x60] sm:$0xff] %v1038
      %1055 = vst [vmem:[#allocation3 + $0x68] sm:$0xff] %v1039
      %1056 = vst [vmem:[#allocation3 + $0x70] sm:$0xff] %v1040
      %1057 = vst [vmem:[#allocation3 + $0x78] sm:$0xff] %v1041
      %v1058 = vld [vmem:[#allocation3] sm:$0xff]
      %v1059 = vld [vmem:[#allocation3 + $0x8] sm:$0xff]
      %v1060 = vld [vmem:[#allocation3 + $0x10] sm:$0xff]
      %v1061 = vld [vmem:[#allocation3 + $0x18] sm:$0xff]
      %v1062 = vld [vmem:[#allocation3 + $0x20] sm:$0xff]
      %v1063 = vld [vmem:[#allocation3 + $0x28] sm:$0xff]
      %v1064 = vld [vmem:[#allocation3 + $0x30] sm:$0xff]
      %v1065 = vld [vmem:[#allocation3 + $0x38] sm:$0xff]
      %v1066 = vld [vmem:[#allocation3 + $0x40] sm:$0xff]
      %v1067 = vld [vmem:[#allocation3 + $0x48] sm:$0xff]
      %v1068 = vld [vmem:[#allocation3 + $0x50] sm:$0xff]
      %v1069 = vld [vmem:[#allocation3 + $0x58] sm:$0xff]
      %v1070 = vld [vmem:[#allocation3 + $0x60] sm:$0xff]
      %v1071 = vld [vmem:[#allocation3 + $0x68] sm:$0xff]
      %v1072 = vld [vmem:[#allocation3 + $0x70] sm:$0xff]
      %v1073 = vld [vmem:[#allocation3 + $0x78] sm:$0xff]
      %s1074 = scalar_lea.vmem %s1, 128
      %v1075 = vld [vmem:[%s1074] sm:$0xff]
      %v1076 = vld [vmem:[%s1074 + $0x8] sm:$0xff]
      %v1077 = vld [vmem:[%s1074 + $0x10] sm:$0xff]
      %v1078 = vld [vmem:[%s1074 + $0x18] sm:$0xff]
      %v1079 = vld [vmem:[%s1074 + $0x20] sm:$0xff]
      %v1080 = vld [vmem:[%s1074 + $0x28] sm:$0xff]
      %v1081 = vld [vmem:[%s1074 + $0x30] sm:$0xff]
      %v1082 = vld [vmem:[%s1074 + $0x38] sm:$0xff]
      %v1083 = vld [vmem:[#allocation2 + $0x8] sm:$0xff]
      %v1084 = vld [vmem:[#allocation2 + $0x10] sm:$0xff]
      %v1085 = vld [vmem:[#allocation2 + $0x18] sm:$0xff]
      %v1086 = vld [vmem:[#allocation2 + $0x28] sm:$0xff]
      %v1087 = vld [vmem:[#allocation2 + $0x30] sm:$0xff]
      %v1088 = vld [vmem:[#allocation2 + $0x38] sm:$0xff]
      %v1089 = vld [vmem:[#allocation2 + $0x48] sm:$0xff]
      %v1090 = vld [vmem:[#allocation2 + $0x50] sm:$0xff]
      %v1091 = vld [vmem:[#allocation2 + $0x58] sm:$0xff]
      %v1092 = vld [vmem:[#allocation2 + $0x68] sm:$0xff]
      %v1093 = vld [vmem:[#allocation2 + $0x70] sm:$0xff]
      %v1094 = vld [vmem:[#allocation2 + $0x78] sm:$0xff]
      %v1095 = vld [vmem:[#allocation2 + $0x88] sm:$0xff]
      %v1096 = vld [vmem:[#allocation2 + $0x90] sm:$0xff]
      %v1097 = vld [vmem:[#allocation2 + $0x98] sm:$0xff]
      %v1098 = vld [vmem:[#allocation2 + $0xa8] sm:$0xff]
      %v1099 = vld [vmem:[#allocation2 + $0xb0] sm:$0xff]
      %v1100 = vld [vmem:[#allocation2 + $0xb8] sm:$0xff]
      %v1101 = vld [vmem:[#allocation2 + $0xc8] sm:$0xff]
      %v1102 = vld [vmem:[#allocation2 + $0xd0] sm:$0xff]
      %v1103 = vld [vmem:[#allocation2 + $0xd8] sm:$0xff]
      %v1104 = vld [vmem:[#allocation2 + $0xe8] sm:$0xff]
      %v1105 = vld [vmem:[#allocation2 + $0xf0] sm:$0xff]
      %v1106 = vld [vmem:[#allocation2 + $0xf8] sm:$0xff]
      %v1107 = vld [vmem:[#allocation2 + $0x108] sm:$0xff]
      %v1108 = vld [vmem:[#allocation2 + $0x110] sm:$0xff]
      %v1109 = vld [vmem:[#allocation2 + $0x118] sm:$0xff]
      %v1110 = vld [vmem:[#allocation2 + $0x128] sm:$0xff]
      %v1111 = vld [vmem:[#allocation2 + $0x130] sm:$0xff]
      %v1112 = vld [vmem:[#allocation2 + $0x138] sm:$0xff]
      %v1113 = vld [vmem:[#allocation2 + $0x148] sm:$0xff]
      %v1114 = vld [vmem:[#allocation2 + $0x150] sm:$0xff]
      %v1115 = vld [vmem:[#allocation2 + $0x158] sm:$0xff]
      %v1116 = vld [vmem:[#allocation2 + $0x168] sm:$0xff]
      %v1117 = vld [vmem:[#allocation2 + $0x170] sm:$0xff]
      %v1118 = vld [vmem:[#allocation2 + $0x178] sm:$0xff]
      %v1127 = vunpack.c.l.b16 %v1075
      %v1128 = vunpack.c.h.b16 %v1075
      %v1129 = vunpack.c.l.b16 %v1076
      %v1130 = vunpack.c.h.b16 %v1076
      %v1131 = vunpack.c.l.b16 %v1077
      %v1132 = vunpack.c.h.b16 %v1077
      %v1133 = vunpack.c.l.b16 %v1078
      %v1134 = vunpack.c.h.b16 %v1078
      %v1135 = vunpack.c.l.b16 %v1079
      %v1136 = vunpack.c.h.b16 %v1079
      %v1137 = vunpack.c.l.b16 %v1080
      %v1138 = vunpack.c.h.b16 %v1080
      %v1139 = vunpack.c.l.b16 %v1081
      %v1140 = vunpack.c.h.b16 %v1081
      %v1141 = vunpack.c.l.b16 %v1082
      %v1142 = vunpack.c.h.b16 %v1082
      %v1143 = vpack.c.b16 %v1129, %v1127
      %v1144 = vpack.c.b16 %v1130, %v1128
      %v1145 = vpack.c.b16 %v1133, %v1131
      %v1146 = vpack.c.b16 %v1134, %v1132
      %v1147 = vpack.c.b16 %v1137, %v1135
      %v1148 = vpack.c.b16 %v1138, %v1136
      %v1149 = vpack.c.b16 %v1141, %v1139
      %v1150 = vpack.c.b16 %v1142, %v1140
      %1191 = vrot.lane.b32.xlu0 %v1083, 112
      %v1192 = vpop.permute.xlu0 %1191
      %1193 = vrot.lane.b32.xlu0 %v1084, 112
      %v1194 = vpop.permute.xlu0 %1193
      %1195 = vrot.lane.b32.xlu0 %v1085, 112
      %v1196 = vpop.permute.xlu0 %1195
      %1197 = vrot.lane.b32.xlu0 %v1086, 112
      %v1198 = vpop.permute.xlu0 %1197
      %1199 = vrot.lane.b32.xlu0 %v1087, 112
      %v1200 = vpop.permute.xlu0 %1199
      %1201 = vrot.lane.b32.xlu0 %v1088, 112
      %v1202 = vpop.permute.xlu0 %1201
      %1203 = vrot.lane.b32.xlu0 %v1089, 112
      %v1204 = vpop.permute.xlu0 %1203
      %1205 = vrot.lane.b32.xlu0 %v1090, 112
      %v1206 = vpop.permute.xlu0 %1205
      %1207 = vrot.lane.b32.xlu0 %v1091, 112
      %v1208 = vpop.permute.xlu0 %1207
      %1209 = vrot.lane.b32.xlu0 %v1092, 112
      %v1210 = vpop.permute.xlu0 %1209
      %1211 = vrot.lane.b32.xlu0 %v1093, 112
      %v1212 = vpop.permute.xlu0 %1211
      %1213 = vrot.lane.b32.xlu0 %v1094, 112
      %v1214 = vpop.permute.xlu0 %1213
      %1215 = vrot.lane.b32.xlu0 %v1095, 112
      %v1216 = vpop.permute.xlu0 %1215
      %1217 = vrot.lane.b32.xlu0 %v1096, 112
      %v1218 = vpop.permute.xlu0 %1217
      %1219 = vrot.lane.b32.xlu0 %v1097, 112
      %v1220 = vpop.permute.xlu0 %1219
      %1221 = vrot.lane.b32.xlu0 %v1098, 112
      %v1222 = vpop.permute.xlu0 %1221
      %1223 = vrot.lane.b32.xlu0 %v1099, 112
      %v1224 = vpop.permute.xlu0 %1223
      %1225 = vrot.lane.b32.xlu0 %v1100, 112
      %v1226 = vpop.permute.xlu0 %1225
      %1227 = vrot.lane.b32.xlu0 %v1101, 112
      %v1228 = vpop.permute.xlu0 %1227
      %1229 = vrot.lane.b32.xlu0 %v1102, 112
      %v1230 = vpop.permute.xlu0 %1229
      %1231 = vrot.lane.b32.xlu0 %v1103, 112
      %v1232 = vpop.permute.xlu0 %1231
      %1233 = vrot.lane.b32.xlu0 %v1104, 112
      %v1234 = vpop.permute.xlu0 %1233
      %1235 = vrot.lane.b32.xlu0 %v1105, 112
      %v1236 = vpop.permute.xlu0 %1235
      %1237 = vrot.lane.b32.xlu0 %v1106, 112
      %v1238 = vpop.permute.xlu0 %1237
      %1239 = vrot.lane.b32.xlu0 %v1107, 112
      %v1240 = vpop.permute.xlu0 %1239
      %1241 = vrot.lane.b32.xlu0 %v1108, 112
      %v1242 = vpop.permute.xlu0 %1241
      %1243 = vrot.lane.b32.xlu0 %v1109, 112
      %v1244 = vpop.permute.xlu0 %1243
      %1245 = vrot.lane.b32.xlu0 %v1110, 112
      %v1246 = vpop.permute.xlu0 %1245
      %1247 = vrot.lane.b32.xlu0 %v1111, 112
      %v1248 = vpop.permute.xlu0 %1247
      %1249 = vrot.lane.b32.xlu0 %v1112, 112
      %v1250 = vpop.permute.xlu0 %1249
      %1251 = vrot.lane.b32.xlu0 %v1113, 112
      %v1252 = vpop.permute.xlu0 %1251
      %1253 = vrot.lane.b32.xlu0 %v1114, 112
      %v1254 = vpop.permute.xlu0 %1253
      %1255 = vrot.lane.b32.xlu0 %v1115, 112
      %v1256 = vpop.permute.xlu0 %1255
      %1257 = vrot.lane.b32.xlu0 %v1116, 112
      %v1258 = vpop.permute.xlu0 %1257
      %1259 = vrot.lane.b32.xlu0 %v1117, 112
      %v1260 = vpop.permute.xlu0 %1259
      %1261 = vrot.lane.b32.xlu0 %v1118, 112
      %v1262 = vpop.permute.xlu0 %1261
      %vm1263 = vcmask 916480
      %v1264 = vsel %vm1263, %v1192, %v1194
      %v1265 = vsel %vm1263, %v1194, %v1196
      %v1266 = vsel %vm1263, %v1198, %v1200
      %v1267 = vsel %vm1263, %v1200, %v1202
      %v1268 = vsel %vm1263, %v1204, %v1206
      %v1269 = vsel %vm1263, %v1206, %v1208
      %v1270 = vsel %vm1263, %v1210, %v1212
      %v1271 = vsel %vm1263, %v1212, %v1214
      %v1272 = vsel %vm1263, %v1216, %v1218
      %v1273 = vsel %vm1263, %v1218, %v1220
      %v1274 = vsel %vm1263, %v1222, %v1224
      %v1275 = vsel %vm1263, %v1224, %v1226
      %v1276 = vsel %vm1263, %v1228, %v1230
      %v1277 = vsel %vm1263, %v1230, %v1232
      %v1278 = vsel %vm1263, %v1234, %v1236
      %v1279 = vsel %vm1263, %v1236, %v1238
      %v1280 = vsel %vm1263, %v1240, %v1242
      %v1281 = vsel %vm1263, %v1242, %v1244
      %v1282 = vsel %vm1263, %v1246, %v1248
      %v1283 = vsel %vm1263, %v1248, %v1250
      %v1284 = vsel %vm1263, %v1252, %v1254
      %v1285 = vsel %vm1263, %v1254, %v1256
      %v1286 = vsel %vm1263, %v1258, %v1260
      %v1287 = vsel %vm1263, %v1260, %v1262
      %v1313 = vsel %vm754, %v1144, 0
      %v1316 = vsel %vm754, %v1146, 0
      %v1319 = vsel %vm754, %v1148, 0
      %v1322 = vsel %vm754, %v1150, 0
      %1324 = vmatprep.subr.bf16.mxu0 %v1265
      %1325 = vmatpush1.bf16.msra.mxu0 %v1264
      %1326 = vmatprep.subr.bf16.mxu0 %v1267
      %1327 = vmatpush1.bf16.msra.mxu0 %v1266
      %1328 = vmatprep.subr.bf16.mxu0 %v1269
      %1329 = vmatpush1.bf16.msra.mxu0 %v1268
      %1330 = vmatprep.subr.bf16.mxu0 %v1271
      %1331 = vmatpush1.bf16.msra.mxu0 %v1270
      %1332 = vmatprep.subr.bf16.mxu0 %v1273
      %1333 = vmatpush1.bf16.msra.mxu0 %v1272
      %1334 = vmatprep.subr.bf16.mxu0 %v1275
      %1335 = vmatpush1.bf16.msra.mxu0 %v1274
      %1336 = vmatprep.subr.bf16.mxu0 %v1277
      %1337 = vmatpush1.bf16.msra.mxu0 %v1276
      %1338 = vmatprep.subr.bf16.mxu0 %v1279
      %1339 = vmatpush1.bf16.msra.mxu0 %v1278
      %1340 = vmatprep.subr.bf16.mxu0 %v1281
      %1341 = vmatpush1.bf16.msra.mxu0 %v1280
      %1342 = vmatprep.subr.bf16.mxu0 %v1283
      %1343 = vmatpush1.bf16.msra.mxu0 %v1282
      %1344 = vmatprep.subr.bf16.mxu0 %v1285
      %1345 = vmatpush1.bf16.msra.mxu0 %v1284
      %1346 = vmatprep.subr.bf16.mxu0 %v1287
      %1347 = vmatpush1.bf16.msra.mxu0 %v1286
      %1348 = vmatprep.subr.bf16.mxu0 0
      %1349 = vmatpush1.bf16.msra.mxu0 0
      %1350 = vmatprep.subr.bf16.mxu0 0
      %1351 = vmatpush1.bf16.msra.mxu0 0
      %1352 = vmatprep.subr.bf16.mxu0 0
      %1353 = vmatpush1.bf16.msra.mxu0 0
      %1354 = vmatprep.subr.bf16.mxu0 0
      %1355 = vmatpush1.bf16.msra.mxu0 0
      %1356 = vmatprep.mubr.bf16.mxu0 %v1313
      %1357 = vmatmul.mubr.bf16.gmra.mrb[0].mxu0 %v1143
      %v1358 = vpop.f32.mrb[0].mxu0
      %v1359 = vadd.f32 0.0, %v1358
      %v1360 = vpop.f32.mrb[0].mxu0
      %v1361 = vadd.f32 0.0, %v1360
      %v1362 = vpop.f32.mrb[0].mxu0
      %v1363 = vadd.f32 0.0, %v1362
      %v1364 = vpop.f32.mrb[0].mxu0
      %v1365 = vadd.f32 0.0, %v1364
      %1366 = vmatprep.mubr.bf16.mxu0 %v1316
      %1367 = vmatmul.mubr.bf16.gmra.mrb[0].mxu0 %v1145
      %v1368 = vpop.f32.mrb[0].mxu0
      %v1369 = vadd.f32 0.0, %v1368
      %v1370 = vpop.f32.mrb[0].mxu0
      %v1371 = vadd.f32 0.0, %v1370
      %v1372 = vpop.f32.mrb[0].mxu0
      %v1373 = vadd.f32 0.0, %v1372
      %v1374 = vpop.f32.mrb[0].mxu0
      %v1375 = vadd.f32 0.0, %v1374
      %1376 = vmatprep.mubr.bf16.mxu0 %v1319
      %1377 = vmatmul.mubr.bf16.gmra.mrb[0].mxu0 %v1147
      %v1378 = vpop.f32.mrb[0].mxu0
      %v1379 = vadd.f32 0.0, %v1378
      %v1380 = vpop.f32.mrb[0].mxu0
      %v1381 = vadd.f32 0.0, %v1380
      %v1382 = vpop.f32.mrb[0].mxu0
      %v1383 = vadd.f32 0.0, %v1382
      %v1384 = vpop.f32.mrb[0].mxu0
      %v1385 = vadd.f32 0.0, %v1384
      %1386 = vmatprep.mubr.bf16.mxu0 %v1322
      %1387 = vmatmul.mubr.bf16.gmra.mrb[0].mxu0 %v1149
      %v1388 = vpop.f32.mrb[0].mxu0
      %v1389 = vadd.f32 0.0, %v1388
      %v1390 = vpop.f32.mrb[0].mxu0
      %v1391 = vadd.f32 0.0, %v1390
      %v1392 = vpop.f32.mrb[0].mxu0
      %v1393 = vadd.f32 0.0, %v1392
      %v1394 = vpop.f32.mrb[0].mxu0
      %v1395 = vadd.f32 0.0, %v1394
      %1396 = vdwg.mxu0
      %v1397 = vadd.f32 %v1058, %v1359
      %v1398 = vadd.f32 %v1059, %v1361
      %v1399 = vadd.f32 %v1060, %v1363
      %v1400 = vadd.f32 %v1061, %v1365
      %v1401 = vadd.f32 %v1062, %v1369
      %v1402 = vadd.f32 %v1063, %v1371
      %v1403 = vadd.f32 %v1064, %v1373
      %v1404 = vadd.f32 %v1065, %v1375
      %v1405 = vadd.f32 %v1066, %v1379
      %v1406 = vadd.f32 %v1067, %v1381
      %v1407 = vadd.f32 %v1068, %v1383
      %v1408 = vadd.f32 %v1069, %v1385
      %v1409 = vadd.f32 %v1070, %v1389
      %v1410 = vadd.f32 %v1071, %v1391
      %v1411 = vadd.f32 %v1072, %v1393
      %v1412 = vadd.f32 %v1073, %v1395
      %1413 = vst [vmem:[#allocation3] sm:$0xff] %v1397
      %1414 = vst [vmem:[#allocation3 + $0x8] sm:$0xff] %v1398
      %1415 = vst [vmem:[#allocation3 + $0x10] sm:$0xff] %v1399
      %1416 = vst [vmem:[#allocation3 + $0x18] sm:$0xff] %v1400
      %1417 = vst [vmem:[#allocation3 + $0x20] sm:$0xff] %v1401
      %1418 = vst [vmem:[#allocation3 + $0x28] sm:$0xff] %v1402
      %1419 = vst [vmem:[#allocation3 + $0x30] sm:$0xff] %v1403
      %1420 = vst [vmem:[#allocation3 + $0x38] sm:$0xff] %v1404
      %1421 = vst [vmem:[#allocation3 + $0x40] sm:$0xff] %v1405
      %1422 = vst [vmem:[#allocation3 + $0x48] sm:$0xff] %v1406
      %1423 = vst [vmem:[#allocation3 + $0x50] sm:$0xff] %v1407
      %1424 = vst [vmem:[#allocation3 + $0x58] sm:$0xff] %v1408
      %1425 = vst [vmem:[#allocation3 + $0x60] sm:$0xff] %v1409
      %1426 = vst [vmem:[#allocation3 + $0x68] sm:$0xff] %v1410
      %1427 = vst [vmem:[#allocation3 + $0x70] sm:$0xff] %v1411
      %1428 = vst [vmem:[#allocation3 + $0x78] sm:$0xff] %v1412
      %v1429 = vld [vmem:[#allocation3] sm:$0xff]
      %v1430 = vld [vmem:[#allocation3 + $0x8] sm:$0xff]
      %v1431 = vld [vmem:[#allocation3 + $0x10] sm:$0xff]
      %v1432 = vld [vmem:[#allocation3 + $0x18] sm:$0xff]
      %v1433 = vld [vmem:[#allocation3 + $0x20] sm:$0xff]
      %v1434 = vld [vmem:[#allocation3 + $0x28] sm:$0xff]
      %v1435 = vld [vmem:[#allocation3 + $0x30] sm:$0xff]
      %v1436 = vld [vmem:[#allocation3 + $0x38] sm:$0xff]
      %v1437 = vld [vmem:[#allocation3 + $0x40] sm:$0xff]
      %v1438 = vld [vmem:[#allocation3 + $0x48] sm:$0xff]
      %v1439 = vld [vmem:[#allocation3 + $0x50] sm:$0xff]
      %v1440 = vld [vmem:[#allocation3 + $0x58] sm:$0xff]
      %v1441 = vld [vmem:[#allocation3 + $0x60] sm:$0xff]
      %v1442 = vld [vmem:[#allocation3 + $0x68] sm:$0xff]
      %v1443 = vld [vmem:[#allocation3 + $0x70] sm:$0xff]
      %v1444 = vld [vmem:[#allocation3 + $0x78] sm:$0xff]
      %v1445 = vld [vmem:[%s2] sm:$0xff]
      %v1446 = vld [vmem:[%s2 + $0x8] sm:$0xff]
      %v1447 = vld [vmem:[%s2 + $0x10] sm:$0xff]
      %v1448 = vld [vmem:[%s2 + $0x18] sm:$0xff]
      %v1449 = vld [vmem:[%s2 + $0x20] sm:$0xff]
      %v1450 = vld [vmem:[%s2 + $0x28] sm:$0xff]
      %v1451 = vld [vmem:[%s2 + $0x30] sm:$0xff]
      %v1452 = vld [vmem:[%s2 + $0x38] sm:$0xff]
      %1454 = vset.pattern.permute.xlu0 0
      %1455 = vperm.xlu0 %1454, %v1445
      %v1456 = vpop.permute.xlu0 %1455
      %1459 = vset.pattern.permute.xlu0 0
      %1460 = vperm.xlu0 %1459, %v1446
      %v1461 = vpop.permute.xlu0 %1460
      %1464 = vset.pattern.permute.xlu0 0
      %1465 = vperm.xlu0 %1464, %v1447
      %v1466 = vpop.permute.xlu0 %1465
      %1469 = vset.pattern.permute.xlu0 0
      %1470 = vperm.xlu0 %1469, %v1448
      %v1471 = vpop.permute.xlu0 %1470
      %1474 = vset.pattern.permute.xlu0 0
      %1475 = vperm.xlu0 %1474, %v1449
      %v1476 = vpop.permute.xlu0 %1475
      %1479 = vset.pattern.permute.xlu0 0
      %1480 = vperm.xlu0 %1479, %v1450
      %v1481 = vpop.permute.xlu0 %1480
      %1484 = vset.pattern.permute.xlu0 0
      %1485 = vperm.xlu0 %1484, %v1451
      %v1486 = vpop.permute.xlu0 %1485
      %1489 = vset.pattern.permute.xlu0 0
      %1490 = vperm.xlu0 %1489, %v1452
      %v1491 = vpop.permute.xlu0 %1490
      %v1493 = vadd.f32 %v1429, %v1456
      %v1494 = vadd.f32 %v1430, %v1456
      %v1495 = vadd.f32 %v1431, %v1461
      %v1496 = vadd.f32 %v1432, %v1461
      %v1497 = vadd.f32 %v1433, %v1466
      %v1498 = vadd.f32 %v1434, %v1466
      %v1499 = vadd.f32 %v1435, %v1471
      %v1500 = vadd.f32 %v1436, %v1471
      %v1501 = vadd.f32 %v1437, %v1476
      %v1502 = vadd.f32 %v1438, %v1476
      %v1503 = vadd.f32 %v1439, %v1481
      %v1504 = vadd.f32 %v1440, %v1481
      %v1505 = vadd.f32 %v1441, %v1486
      %v1506 = vadd.f32 %v1442, %v1486
      %v1507 = vadd.f32 %v1443, %v1491
      %v1508 = vadd.f32 %v1444, %v1491
      %v1509 = vmax.f32 %v1493, 0.0
      %v1510 = vmax.f32 %v1494, 0.0
      %v1511 = vmax.f32 %v1495, 0.0
      %v1512 = vmax.f32 %v1496, 0.0
      %v1513 = vmax.f32 %v1497, 0.0
      %v1514 = vmax.f32 %v1498, 0.0
      %v1515 = vmax.f32 %v1499, 0.0
      %v1516 = vmax.f32 %v1500, 0.0
      %v1517 = vmax.f32 %v1501, 0.0
      %v1518 = vmax.f32 %v1502, 0.0
      %v1519 = vmax.f32 %v1503, 0.0
      %v1520 = vmax.f32 %v1504, 0.0
      %v1521 = vmax.f32 %v1505, 0.0
      %v1522 = vmax.f32 %v1506, 0.0
      %v1523 = vmax.f32 %v1507, 0.0
      %v1524 = vmax.f32 %v1508, 0.0
      %v1525 = vpack.c.bf16 %v1511, %v1509
      %v1526 = vpack.c.bf16 %v1512, %v1510
      %v1527 = vpack.c.bf16 %v1515, %v1513
      %v1528 = vpack.c.bf16 %v1516, %v1514
      %v1529 = vpack.c.bf16 %v1519, %v1517
      %v1530 = vpack.c.bf16 %v1520, %v1518
      %v1531 = vpack.c.bf16 %v1523, %v1521
      %v1532 = vpack.c.bf16 %v1524, %v1522
      %v1533 = vld [vmem:[%s3] sm:$0xf]
      %v1534 = vld [vmem:[%s4] sm:$0xff]
      %1536 = vset.pattern.permute.xlu0 0
      %1537 = vperm.xlu0 %1536, %v1534
      %v1538 = vpop.permute.xlu0 %1537
      %v1541 = vsel %vm754, %v1533, 0
      %1543 = vmatprep.subr.bf16.mxu0 %v1526
      %1544 = vmatpush1.bf16.msra.mxu0 %v1525
      %1545 = vmatprep.subr.bf16.mxu0 %v1528
      %1546 = vmatpush1.bf16.msra.mxu0 %v1527
      %1547 = vmatprep.subr.bf16.mxu0 %v1530
      %1548 = vmatpush1.bf16.msra.mxu0 %v1529
      %1549 = vmatprep.subr.bf16.mxu0 %v1532
      %1550 = vmatpush1.bf16.msra.mxu0 %v1531
      %1551 = vmatprep.subr.bf16.mxu0 0
      %1552 = vmatpush1.bf16.msra.mxu0 0
      %1553 = vmatprep.subr.bf16.mxu0 0
      %1554 = vmatpush1.bf16.msra.mxu0 0
      %1555 = vmatprep.subr.bf16.mxu0 0
      %1556 = vmatpush1.bf16.msra.mxu0 0
      %1557 = vmatprep.subr.bf16.mxu0 0
      %1558 = vmatpush1.bf16.msra.mxu0 0
      %1559 = vmatprep.subr.bf16.mxu0 0
      %1560 = vmatpush1.bf16.msra.mxu0 0
      %1561 = vmatprep.subr.bf16.mxu0 0
      %1562 = vmatpush1.bf16.msra.mxu0 0
      %1563 = vmatprep.subr.bf16.mxu0 0
      %1564 = vmatpush1.bf16.msra.mxu0 0
      %1565 = vmatprep.subr.bf16.mxu0 0
      %1566 = vmatpush1.bf16.msra.mxu0 0
      %1567 = vmatprep.subr.bf16.mxu0 0
      %1568 = vmatpush1.bf16.msra.mxu0 0
      %1569 = vmatprep.subr.bf16.mxu0 0
      %1570 = vmatpush1.bf16.msra.mxu0 0
      %1571 = vmatprep.subr.bf16.mxu0 0
      %1572 = vmatpush1.bf16.msra.mxu0 0
      %1573 = vmatprep.subr.bf16.mxu0 0
      %1574 = vmatpush1.bf16.msra.mxu0 0
      %1575 = vmatprep.mubr.bf16.mxu0 0
      %1576 = vmatmul.mubr.bf16.gmra.mrb[0].mxu0 %v1541
      %v1577 = vpop.f32.mrb[0].mxu0
      %v1578 = vadd.f32 %v1538, %v1577
      %v1579 = vpop.f32.mrb[0].mxu0
      %v1580 = vadd.f32 %v1538, %v1579
      %v1581 = vpop.f32.mrb[0].mxu0
      %v1582 = vpop.f32.mrb[0].mxu0
      %1583 = vdwg.mxu0
      %v1584 = vxor.u32 %v1578, 2147483648
      %v1585 = vxor.u32 %v1580, 2147483648
      %v1586 = vmul.f32 %v1584, 1.442695
      %v1587 = vpow.pop %v1586
      %v1588 = vmul.f32 %v1585, 1.442695
      %v1589 = vpow.pop %v1588
      %v1590 = vadd.f32 %v1587, 1.0
      %v1591 = vadd.f32 %v1589, 1.0
      %v1592 = vrcp.pop %v1590
      %v1593 = vmul.f32 1.0, %v1592
      %v1594 = vrcp.pop %v1591
      %v1595 = vmul.f32 1.0, %v1594
      %1596 = vst [vmem:[%s251] sm:$0xff] %v1593
      %1597 = vst [vmem:[%s251 + $0x8] sm:$0xff] %v1595
      %p1598 = scmp.lt.s32.totalorder %s17, 1
      %s1599 = scalar_select %p1598, %s17, 1
      %s1600 = smul.addr %s1599, 2
      %s1601 = smul.addr %s1600, 8
      %s1602 = scalar_lea.vmem %s6, %s1601
      // Predicated region
      $region45: #{_segmenter_forward_impl.1} parent=43 // pred_check
        %p1603 = pneg %p166
      $region46: #{_segmenter_forward_impl.1} parent=43 // pred_check_branch
        %1605 = sbr.rel (%p1603) target = $region48
      $region47: #{_segmenter_forward_impl.1} parent=43 // pred_region
        _
      $region48: #{_segmenter_forward_impl.1} parent=43 // pred_fallthru
        _
    $region44: #{_segmenter_forward_impl.1} parent=5 // pred_fallthru
      _
    %p1606 = scmp.le.s32.totalorder 2, %s12
    // Predicated region
    $region49: #{_segmenter_forward_impl.1} parent=5 // pred_check
      %p1607 = pneg %p1606
    $region50: #{_segmenter_forward_impl.1} parent=5 // pred_check_branch
      %1609 = sbr.rel (%p1607) target = $region52
    $region51: #{_segmenter_forward_impl.1} parent=5 // pred_region
      %s1610 = ssub.s32 %s12, 2
      // Predicated region
      $region53: #{_segmenter_forward_impl.1} parent=51 // pred_check
        %p1611 = pneg %p172
      $region54: #{_segmenter_forward_impl.1} parent=51 // pred_check_branch
        %1613 = sbr.rel (%p1611) target = $region56
      $region55: #{_segmenter_forward_impl.1} parent=51 // pred_region
        %p1614 = scmp.lt.s32.totalorder %s18, 1
        %s1615 = scalar_select %p1614, %s18, 1
        %s1616 = smul.addr %s1615, 2
        %s1617 = smul.addr %s1616, 8
        %s1618 = scalar_lea.vmem %s6, %s1617
      $region56: #{_segmenter_forward_impl.1} parent=51 // pred_fallthru
        _
    $region52: #{_segmenter_forward_impl.1} parent=5 // pred_fallthru
      _
  $region6: #{_segmenter_forward_impl.1} parent=0 // loop_footer
    %s16 = sadd.s32 1, %s12
  $region7: #{_segmenter_forward_impl.1} parent=0 // loop_footer_branch
    %11 = sbr.rel target = $region3
  $region8: #{_segmenter_forward_impl.1} parent=0 // loop_exit
    _

</llo_original>
